<compile_context>
chip_gen: v7x
topology: tpu7x:2x2x1
jax: 0.10.0
libtpu: 0.0.40
codegen_flags: <defaults>
</compile_context>

<pallas_src>
import functools

import jax
import jax.numpy as jnp
from jax.experimental import pallas as pl
from jax.experimental.pallas import tpu as pltpu


def _round_up(x, m):
    return ((x + m - 1) // m) * m


def _center_loss_kernel(pred_ref, feats_ref, centers_ref, out_ref, *, n_rows):
    """One row tile: fused argmax -> one-hot -> MXU gather of centers[label]
    -> clipped squared distance -> row-masked per-tile partial sum."""
    t = pl.program_id(0)
    tm, num_classes = pred_ref.shape

    # ---- fused argmax(predicts, axis=-1) with first-index tie-break ----
    p = pred_ref[...]                                              # (tm, C)
    row_max = jnp.max(p, axis=1, keepdims=True)                    # (tm, 1)
    col = jax.lax.broadcasted_iota(jnp.int32, (tm, num_classes), 1).astype(
        jnp.float32)                                               # (tm, C)
    first = jnp.min(jnp.where(p == row_max, col, float(num_classes)),
                    axis=1, keepdims=True)                         # (tm, 1)
    one_hot = (col == first).astype(jnp.float32)                   # (tm, C)

    # ---- gather centers[label] on the (otherwise idle) MXU ----
    gathered = jnp.dot(one_hot, centers_ref[...],
                       preferred_element_type=jnp.float32,
                       precision=jax.lax.Precision.HIGHEST)        # (tm, D)

    # ---- squared distance + reference clip ----
    diff = feats_ref[...].astype(jnp.float32) - gathered            # (tm, D)  VPU
    d = jnp.sum(diff * diff, axis=1, keepdims=True)                 # (tm, 1)  XLU
    d = jnp.clip(d, 1e-12, 1e12)

    # ---- mask ragged / out-of-bounds rows, then lane-dense per-tile sum ----
    row = t * tm + jax.lax.broadcasted_iota(jnp.int32, (tm, 1), 0)
    d = jnp.where(row < n_rows, d, 0.0)
    out_ref[...] = jnp.sum(jnp.broadcast_to(d, (tm, 128)), axis=0, keepdims=True)


def center_loss(features, predicts, centers, *, row_tile=256):
    """features: [B, T, D], predicts: [B, T, C] (logits), centers: [C, D].

    Returns {"loss_center": scalar} with the CenterLoss.forward semantics
    (float32 instead of the reference's float64).
    """
    B, T, D = features.shape
    C = centers.shape[0]
    assert centers.shape[1] == D
    N = B * T

    feats = features.reshape(N, D)
    preds = predicts.reshape(N, C)
    centers_f32 = centers.astype(jnp.float32)

    # Corner case: fewer than 8 rows -> pad up to one 8-row sublane tile
    # (trivial at that size); padded rows are masked in-kernel via n_rows.
    n_arr = N
    if N < 8:
        pad = 8 - N
        feats = jnp.pad(feats, ((0, pad), (0, 0)))
        preds = jnp.pad(preds, ((0, pad), (0, 0)))
        n_arr = 8

    # Row tile: multiple of 8, <= row_tile, and small enough that the grid has
    # >= 2 steps when N allows it (so the "parallel" axis can shard across both
    # TensorCores on v7x).  Ragged final tiles are masked in-kernel.
    tm = _round_up(min(max(row_tile, 8), pl.cdiv(n_arr, 2)), 8)
    num_tiles = pl.cdiv(n_arr, tm)

    # Explicit scoped-VMEM budget: double-buffered logits / feats / centers /
    # output blocks plus margin (v5e's default scope is only 16 MiB).
    vmem_need = 4 * 2 * (tm * C + tm * D + C * D + 128)
    vmem_limit = int(min(max(vmem_need + (4 << 20), 16 << 20), 64 << 20))

    kernel = functools.partial(_center_loss_kernel, n_rows=N)

    partials = pl.pallas_call(
        kernel,
        out_shape=jax.ShapeDtypeStruct((1, num_tiles * 128), jnp.float32),
        grid_spec=pltpu.PrefetchScalarGridSpec(
            num_scalar_prefetch=0,
            grid=(num_tiles,),                                     # independent row tiles
            in_specs=[
                pl.BlockSpec((tm, C), lambda t: (t, 0)),           # logits tile (streamed)
                pl.BlockSpec((tm, D), lambda t: (t, 0)),           # feats tile (streamed)
                pl.BlockSpec((C, D), lambda t: (0, 0)),            # centers (VMEM-resident)
            ],
            out_specs=pl.BlockSpec((1, 128), lambda t: (0, t)),    # lane-dense partial sums
        ),
        compiler_params=pltpu.CompilerParams(
            dimension_semantics=("parallel",),                     # megacore-shardable on v7x
            vmem_limit_bytes=vmem_limit),
    )(preds, feats, centers_f32)

    # One partial sum per tile (replicated across 128 lanes) -> tiny final sum,
    # mean over the real rows, plus the reference's epsilon from clipping the
    # (C - 1) masked-out zero entries of every row up to 1e-12.
    per_tile = partials.reshape(num_tiles, 128)[:, 0]
    loss = (jnp.sum(per_tile) / jnp.float32(N)
            + jnp.float32(C - 1) * jnp.float32(1e-12))
    return {"loss_center": loss}


def _center_loss_ref(features, predicts, centers):
    """Pure-JAX float32 reference of the PyTorch forward (full masked matrix)."""
    B, T, D = features.shape
    C = centers.shape[0]
    N = B * T
    feats = features.reshape(N, D).astype(jnp.float32)
    cent = centers.astype(jnp.float32)
    labels = jnp.argmax(predicts, axis=2).reshape(N)
    sq_f = jnp.sum(feats * feats, axis=1, keepdims=True)
    sq_c = jnp.sum(cent * cent, axis=1, keepdims=True)
    distmat = sq_f + sq_c.T - 2.0 * jnp.dot(feats, cent.T,
                                            precision=jax.lax.Precision.HIGHEST)
    mask = (labels[:, None] == jnp.arange(C)[None, :]).astype(jnp.float32)
    dist = jnp.clip(distmat * mask, 1e-12, 1e12)
    return jnp.sum(dist) / N


if __name__ == "__main__":
    # Small, deterministic shapes consistent with the module's forward.
    B, T = 2, 8              # batch, sequence length
    D = 96                   # feat_dim (module default)
    C = 512                  # num_classes (small stand-in for 6625)

    key = jax.random.PRNGKey(0)
    k_feat, k_pred, k_cent = jax.random.split(key, 3)
    features = jax.random.normal(k_feat, (B, T, D), dtype=jnp.float32)
    predicts = jax.random.normal(k_pred, (B, T, C), dtype=jnp.float32)
    # deterministic stand-in for torch.randn([num_classes, feat_dim])
    centers = jax.random.normal(k_cent, (C, D), dtype=jnp.float32)

    out = center_loss(features, predicts, centers)
    loss = jax.block_until_ready(out["loss_center"])

    ref = jax.block_until_ready(_center_loss_ref(features, predicts, centers))
    assert jnp.allclose(loss, ref, rtol=1e-4, atol=1e-4), (loss, ref)

    print("KERNEL_OK")
</pallas_src>

<mosaic_0001>
module attributes {stable_mosaic.version = 11 : i64} {
  func.func @_center_loss_kernel(%arg0: i32, %arg1: memref<8x512xf32, #tpu.memory_space<vmem>>, %arg2: memref<8x96xf32, #tpu.memory_space<vmem>>, %arg3: memref<512x96xf32, #tpu.memory_space<vmem>>, %arg4: memref<1x128xf32, #tpu.memory_space<vmem>>) attributes {dimension_semantics = [#tpu.dimension_semantics<parallel>], iteration_bounds = array<i64: 2>, scalar_prefetch = 0 : i64, scratch_operands = 0 : i64, tpu.core_type = #tpu.core_type<tc>, window_params = [{transform_indices = @transform_0, window_bounds = array<i64: 8, 512>}, {transform_indices = @transform_1, window_bounds = array<i64: 8, 96>}, {pipeline_mode = #tpu.pipeline_mode<synchronous>, transform_indices = @transform_2, window_bounds = array<i64: 512, 96>}, {transform_indices = @transform_3, window_bounds = array<i64: 1, 128>}]} {
    %c0 = arith.constant 0 : index
    %c0_0 = arith.constant 0 : index
    %0 = vector.load %arg1[%c0, %c0_0] : memref<8x512xf32, #tpu.memory_space<vmem>>, vector<8x512xf32>
    %cst = arith.constant dense<0xFF800000> : vector<8xf32>
    %1 = vector.multi_reduction <maximumf>, %0, %cst [1] : vector<8x512xf32> to vector<8xf32>
    %2 = vector.shape_cast %1 : vector<8xf32> to vector<8x1xf32>
    %3 = tpu.iota {dimensions = array<i32: 1>} : vector<8x512xi32>
    %4 = arith.sitofp %3 : vector<8x512xi32> to vector<8x512xf32>
    %5 = vector.broadcast %2 : vector<8x1xf32> to vector<8x512xf32>
    %6 = arith.cmpf oeq, %0, %5 : vector<8x512xf32>
    %cst_1 = arith.constant 5.120000e+02 : f32
    %7 = vector.broadcast %cst_1 : f32 to vector<8x512xf32>
    %8 = arith.select %6, %4, %7 : vector<8x512xi1>, vector<8x512xf32>
    %cst_2 = arith.constant dense<0x7F800000> : vector<8xf32>
    %9 = vector.multi_reduction <minimumf>, %8, %cst_2 [1] : vector<8x512xf32> to vector<8xf32>
    %10 = vector.shape_cast %9 : vector<8xf32> to vector<8x1xf32>
    %11 = vector.broadcast %10 : vector<8x1xf32> to vector<8x512xf32>
    %12 = arith.cmpf oeq, %4, %11 : vector<8x512xf32>
    %13 = arith.extui %12 : vector<8x512xi1> to vector<8x512xi32>
    %14 = arith.sitofp %13 : vector<8x512xi32> to vector<8x512xf32>
    %c0_3 = arith.constant 0 : index
    %c0_4 = arith.constant 0 : index
    %15 = vector.load %arg3[%c0_3, %c0_4] : memref<512x96xf32, #tpu.memory_space<vmem>>, vector<512x96xf32>
    %cst_5 = arith.constant dense<0.000000e+00> : vector<8x96xf32>
    %16 = tpu.matmul %14, %15, %cst_5 {dimension_numbers = #tpu.dot_dimension_numbers<[1], [0], [0], [1], [0, 0, 1, 1], [], []>, precision = #tpu.contract_precision<fp32>} : vector<8x512xf32>, vector<512x96xf32>, vector<8x96xf32> -> vector<8x96xf32>
    %c0_6 = arith.constant 0 : index
    %c0_7 = arith.constant 0 : index
    %17 = vector.load %arg2[%c0_6, %c0_7] : memref<8x96xf32, #tpu.memory_space<vmem>>, vector<8x96xf32>
    %18 = arith.subf %17, %16 : vector<8x96xf32>
    %19 = arith.mulf %18, %18 : vector<8x96xf32>
    %cst_8 = arith.constant dense<0.000000e+00> : vector<8xf32>
    %20 = vector.multi_reduction <add>, %19, %cst_8 [1] : vector<8x96xf32> to vector<8xf32>
    %21 = vector.shape_cast %20 : vector<8xf32> to vector<8x1xf32>
    %cst_9 = arith.constant 9.99999996E-13 : f32
    %cst_10 = arith.constant 9.99999995E+11 : f32
    %22 = vector.broadcast %cst_9 : f32 to vector<8x1xf32>
    %23 = arith.maximumf %22, %21 : vector<8x1xf32>
    %24 = vector.broadcast %cst_10 : f32 to vector<8x1xf32>
    %25 = arith.minimumf %24, %23 : vector<8x1xf32>
    %c8_i32 = arith.constant 8 : i32
    %26 = arith.muli %arg0, %c8_i32 : i32
    %27 = tpu.iota {dimensions = array<i32: 0>} : vector<8x1xi32>
    %28 = vector.broadcast %26 : i32 to vector<8x1xi32>
    %29 = arith.addi %28, %27 : vector<8x1xi32>
    %c16_i32 = arith.constant 16 : i32
    %30 = vector.broadcast %c16_i32 : i32 to vector<8x1xi32>
    %31 = arith.cmpi slt, %29, %30 : vector<8x1xi32>
    %cst_11 = arith.constant 0.000000e+00 : f32
    %32 = vector.broadcast %cst_11 : f32 to vector<8x1xf32>
    %33 = arith.select %31, %25, %32 : vector<8x1xi1>, vector<8x1xf32>
    %34 = vector.shape_cast %33 : vector<8x1xf32> to vector<8x1xf32>
    %35 = vector.broadcast %34 : vector<8x1xf32> to vector<8x128xf32>
    %cst_12 = arith.constant dense<0.000000e+00> : vector<128xf32>
    %36 = vector.multi_reduction <add>, %35, %cst_12 [0] : vector<8x128xf32> to vector<128xf32>
    %37 = vector.shape_cast %36 : vector<128xf32> to vector<1x128xf32>
    %c0_13 = arith.constant 0 : index
    %c0_14 = arith.constant 0 : index
    %38 = vector.load %arg4[%c0_13, %c0_14] : memref<1x128xf32, #tpu.memory_space<vmem>>, vector<1x128xf32>
    tpu.vector_store %arg4[%c0_13, %c0_14], %37 {strides = array<i32>} : memref<1x128xf32, #tpu.memory_space<vmem>>, vector<1x128xf32>,
    return
  }
  func.func @transform_0(%arg0: i32) -> (i32, i32) {
    %c0_i32 = arith.constant 0 : i32
    %c0_i32_0 = arith.constant 0 : i32
    return %arg0, %c0_i32 : i32, i32
  }
  func.func @transform_1(%arg0: i32) -> (i32, i32) {
    %c0_i32 = arith.constant 0 : i32
    %c0_i32_0 = arith.constant 0 : i32
    return %arg0, %c0_i32 : i32, i32
  }
  func.func @transform_2(%arg0: i32) -> (i32, i32) {
    %c0_i32 = arith.constant 0 : i32
    %c0_i32_0 = arith.constant 0 : i32
    %c0_i32_1 = arith.constant 0 : i32
    return %c0_i32, %c0_i32_0 : i32, i32
  }
  func.func @transform_3(%arg0: i32) -> (i32, i32) {
    %c0_i32 = arith.constant 0 : i32
    %c0_i32_0 = arith.constant 0 : i32
    return %c0_i32, %arg0 : i32, i32
  }
}

</mosaic_0001>

<llo_original>
// kernel: tpu_custom_call.1
$region0: #{tpu_custom_call.1}
  #allocation0 [shape = 'u32[]', space=smem, size = 0x4, offset = 0x4, fixed_abs, tag = 'smem constant byte address 0x4 - core index']
  #allocation1 [shape = 'u32[144,128]{1,0:T(1,128)}', space=vmem, size = 0x12000, scoped, tag = 'internal scratch']
  %s0 = inlined_call_operand.vmem [shape: f32[16,512], index: 0, kind: input, shape index: {}]
  %s1 = inlined_call_operand.vmem [shape: f32[16,96], index: 1, kind: input, shape index: {}]
  %s2 = inlined_call_operand.vmem [shape: f32[512,96], index: 2, kind: input, shape index: {}]
  %s3 = inlined_call_operand.hbm [shape: f32[1,256], index: 3, kind: output, shape index: {}]
  %s4 = sld [smem:[#allocation0]]
  $region45: #{tpu_custom_call.1} parent=0
    _
  %s6 = ssub.s32 1, %s4
  %s7 = scalar_select 0, %s6, %s4
  $region1: #{tpu_custom_call.1} parent=0
    #allocation2 [shape = 'u8[1024]{0}', space=vmem, size = 0x400, scoped, tag = 'output window, operand 0']
    #allocation3 [shape = 's32[2]{0}', space=sflag, size = 0x8, scoped, tag = 'scoped memory for tpu_custom_call.1']
    %8 = vsyncpa [#allocation3], 0
    %s9 = scalar_lea.sflag [#allocation3], 1
    %10 = vsyncpa %s9, 0
    loop: start=0, step=1, limit=4
    $region2: #{tpu_custom_call.1} parent=1 // loop_pre_header
      _
    $region3: #{tpu_custom_call.1} parent=1 // loop_header
      %s12 = sphi 0, %s16
      %p13 = scmp.ge.s32.totalorder %s12, 4
      %s22 = sphi 0, %s24
      %s25 = sphi 0, %s22
      %s26 = sphi 0, %s25
      %s42 = sphi 0, %s26
      %s48 = sphi 0, %s50
      %s51 = sphi 0, %s48
      %s52 = sphi 0, %s51
      %s68 = sphi 0, %s52
      %s72 = sphi 0, %s72
      %s74 = sphi 0, %s72
      %s75 = sphi 0, %s74
      %s89 = sphi 0, %s75
      %s95 = sphi 0, %s97
      %s98 = sphi 0, %s95
      %s99 = sphi 0, %s98
      %s115 = sphi 0, %s99
    $region4: #{tpu_custom_call.1} parent=1 // loop_header_branch
      %15 = sbr.rel (%p13) target = $region8
    $region5: #{tpu_custom_call.1} parent=1 // loop_body
      %s17 = ssub.s32 %s12, 1
      %s18 = ssub.s32 %s12, 2
      %s19 = sadd.s32 %s12, 1
      %s20 = ssub.s32 %s12, %s19
      %p21 = scmp.eq.s32.totalorder %s20, 0
      %s23 = sadd.s32 %s22, 1
      %s24 = scalar_select %p21, %s22, %s23
      %p27 = pneg %p21
      %p28 = scmp.eq.s32.totalorder %s12, 1
      %p29 = por %p27, %p28
      %p30 = scmp.ne.s32.totalorder %s22, %s25
      %p31 = scmp.eq.s32.totalorder %s12, 0
      %p32 = por %p30, %p31
      %p33 = scmp.ne.s32.totalorder %s22, %s25
      %p34 = scmp.eq.s32.totalorder %s17, 1
      %p35 = por %p33, %p34
      %p36 = scmp.ne.s32.totalorder %s25, %s26
      %p37 = scmp.eq.s32.totalorder %s17, 0
      %p38 = por %p36, %p37
      %p39 = scmp.ne.s32.totalorder %s25, %s26
      %p40 = scmp.eq.s32.totalorder %s18, 1
      %p41 = por %p39, %p40
      %p43 = scmp.ne.s32.totalorder %s26, %s42
      %p44 = scmp.eq.s32.totalorder %s18, 0
      %p45 = por %p43, %p44
      %s46 = ssub.s32 %s12, %s19
      %p47 = scmp.eq.s32.totalorder %s46, 0
      %s49 = sadd.s32 %s48, 1
      %s50 = scalar_select %p47, %s48, %s49
      %p53 = pneg %p47
      %p54 = scmp.eq.s32.totalorder %s12, 1
      %p55 = por %p53, %p54
      %p56 = scmp.ne.s32.totalorder %s48, %s51
      %p57 = scmp.eq.s32.totalorder %s12, 0
      %p58 = por %p56, %p57
      %p59 = scmp.ne.s32.totalorder %s48, %s51
      %p60 = scmp.eq.s32.totalorder %s17, 1
      %p61 = por %p59, %p60
      %p62 = scmp.ne.s32.totalorder %s51, %s52
      %p63 = scmp.eq.s32.totalorder %s17, 0
      %p64 = por %p62, %p63
      %p65 = scmp.ne.s32.totalorder %s51, %s52
      %p66 = scmp.eq.s32.totalorder %s18, 1
      %p67 = por %p65, %p66
      %p69 = scmp.ne.s32.totalorder %s52, %s68
      %p70 = scmp.eq.s32.totalorder %s18, 0
      %p71 = por %p69, %p70
      %s73 = sadd.s32 %s72, 1
      %p76 = scmp.eq.s32.totalorder %s12, 1
      %p77 = scmp.ne.s32.totalorder %s72, %s74
      %p78 = scmp.eq.s32.totalorder %s12, 0
      %p79 = por %p77, %p78
      %p80 = scmp.ne.s32.totalorder %s72, %s74
      %p81 = scmp.eq.s32.totalorder %s17, 1
      %p82 = por %p80, %p81
      %p83 = scmp.ne.s32.totalorder %s74, %s75
      %p84 = scmp.eq.s32.totalorder %s17, 0
      %p85 = por %p83, %p84
      %p86 = scmp.ne.s32.totalorder %s74, %s75
      %p87 = scmp.eq.s32.totalorder %s18, 1
      %p88 = por %p86, %p87
      %p90 = scmp.ne.s32.totalorder %s75, %s89
      %p91 = scmp.eq.s32.totalorder %s18, 0
      %p92 = por %p90, %p91
      %s93 = ssub.s32 %s12, %s19
      %p94 = scmp.eq.s32.totalorder %s93, 0
      %s96 = sadd.s32 %s95, 1
      %s97 = scalar_select %p94, %s95, %s96
      %p100 = pneg %p94
      %p101 = scmp.eq.s32.totalorder %s12, 1
      %p102 = por %p100, %p101
      %p103 = scmp.ne.s32.totalorder %s95, %s98
      %p104 = scmp.eq.s32.totalorder %s12, 0
      %p105 = por %p103, %p104
      %p106 = scmp.ne.s32.totalorder %s95, %s98
      %p107 = scmp.eq.s32.totalorder %s17, 1
      %p108 = por %p106, %p107
      %p109 = scmp.ne.s32.totalorder %s98, %s99
      %p110 = scmp.eq.s32.totalorder %s17, 0
      %p111 = por %p109, %p110
      %p112 = scmp.ne.s32.totalorder %s98, %s99
      %p113 = scmp.eq.s32.totalorder %s18, 1
      %p114 = por %p112, %p113
      %p116 = scmp.ne.s32.totalorder %s99, %s115
      %p117 = scmp.eq.s32.totalorder %s18, 0
      %p118 = por %p116, %p117
      %p119 = scmp.le.s32.totalorder 1, %s12
      %p120 = scmp.lt.s32.totalorder %s12, 3
      %p121 = pnand %p119, %p120
      %p122 = pneg %p121
      // Predicated region
      $region9: #{tpu_custom_call.1} parent=5 // pred_check
        _
      $region10: #{tpu_custom_call.1} parent=5 // pred_check_branch
        %124 = sbr.rel (%p121) target = $region12
      $region11: #{tpu_custom_call.1} parent=5 // pred_region
        %s125 = ssub.s32 %s12, 1
        // Predicated region
        $region13: #{tpu_custom_call.1} parent=11 // pred_check
          %p126 = pneg %p85
        $region14: #{tpu_custom_call.1} parent=11 // pred_check_branch
          %128 = sbr.rel (%p126) target = $region16
        $region15: #{tpu_custom_call.1} parent=11 // pred_region
          _
        $region16: #{tpu_custom_call.1} parent=11 // pred_fallthru
          _
      $region12: #{tpu_custom_call.1} parent=5 // pred_fallthru
        _
      %p129 = scmp.lt.s32.totalorder %s12, 2
      // Predicated region
      $region17: #{tpu_custom_call.1} parent=5 // pred_check
        %p130 = pneg %p129
      $region18: #{tpu_custom_call.1} parent=5 // pred_check_branch
        %132 = sbr.rel (%p130) target = $region20
      $region19: #{tpu_custom_call.1} parent=5 // pred_region
        // Predicated region
        $region21: #{tpu_custom_call.1} parent=19 // pred_check
          %p133 = pneg %p32
        $region22: #{tpu_custom_call.1} parent=19 // pred_check_branch
          %135 = sbr.rel (%p133) target = $region24
        $region23: #{tpu_custom_call.1} parent=19 // pred_region
          %p136 = scmp.lt.s32.totalorder %s12, 1
          %s137 = scalar_select %p136, %s12, 1
          %s138 = smul.addr %s137, 4
          %s139 = smul.addr %s138, 8
          %s140 = scalar_lea.vmem %s0, %s139
        $region24: #{tpu_custom_call.1} parent=19 // pred_fallthru
          _
        // Predicated region
        $region25: #{tpu_custom_call.1} parent=19 // pred_check
          %p141 = pneg %p58
        $region26: #{tpu_custom_call.1} parent=19 // pred_check_branch
          %143 = sbr.rel (%p141) target = $region28
        $region27: #{tpu_custom_call.1} parent=19 // pred_region
          %p144 = scmp.lt.s32.totalorder %s12, 1
          %s145 = scalar_select %p144, %s12, 1
          %s146 = smul.addr %s145, 8
          %s147 = scalar_lea.vmem %s1, %s146
        $region28: #{tpu_custom_call.1} parent=19 // pred_fallthru
          _
      $region20: #{tpu_custom_call.1} parent=5 // pred_fallthru
        _
      %p148 = scmp.le.s32.totalorder 1, %s12
      %p149 = scmp.lt.s32.totalorder %s12, 3
      %p150 = pnand %p148, %p149
      %p151 = pneg %p150
      // Predicated region
      $region29: #{tpu_custom_call.1} parent=5 // pred_check
        _
      $region30: #{tpu_custom_call.1} parent=5 // pred_check_branch
        %153 = sbr.rel (%p150) target = $region32
      $region31: #{tpu_custom_call.1} parent=5 // pred_region
        %s154 = ssub.s32 %s12, 1
        %p155 = scmp.lt.s32.totalorder %s17, 1
        %s156 = scalar_select %p155, %s17, 1
        %s157 = smul.addr %s156, 4
        %s158 = smul.addr %s157, 8
        %s159 = scalar_lea.vmem %s0, %s158
        %p160 = pneg %p38
        %p161 = pneg %p35
        %p162 = scmp.lt.s32.totalorder %s17, 1
        %s163 = scalar_select %p162, %s17, 1
        %s164 = smul.addr %s163, 8
        %s165 = scalar_lea.vmem %s1, %s164
        %p166 = pneg %p64
        %p167 = pneg %p61
        %p168 = pneg %p85
        %p169 = pneg %p82
        %p170 = pneg %p111
        %p171 = pneg %p108
        %s172 = sand.u32 %s98, 1
        %s173 = scalar_lea.sflag [#allocation3], %s172
        %s174 = sand.u32 %s98, 1
        %s175 = scalar_lea.vmem [#allocation2], %s174
        %p176 = scmp.lt.s32.totalorder %s17, 1
        %s177 = scalar_select %p176, %s17, 1
        %s178 = smul.addr %s177, 4
        %s179 = smul.addr %s178, 8
        %s180 = scalar_lea.vmem %s0, %s179
        %p181 = scmp.lt.s32.totalorder %s17, 1
        %s182 = scalar_select %p181, %s17, 1
        %s183 = smul.addr %s182, 8
        %s184 = scalar_lea.vmem %s1, %s183
        %v185 = vld [vmem:[%s180] sm:$0xff]
        %v186 = vld [vmem:[%s180 + $0x8] sm:$0xff]
        %v187 = vld [vmem:[%s180 + $0x10] sm:$0xff]
        %v188 = vld [vmem:[%s180 + $0x18] sm:$0xff]
        %v189 = vmax.f32 %v185, %v186
        %v190 = vmax.f32 %v187, %v188
        %v191 = vmax.f32 %v189, %v190
        %192 = vmax.xlane.f32.xlu0 %v191
        %v193 = vpop.xlane.xlu0 %192
        %v194 = vlaneseq
        %v195 = vand.u32 %v194, 127
        %v196 = vadd.s32 %v195, 128
        %v197 = vadd.s32 %v195, 256
        %v198 = vadd.s32 %v195, 384
        %v199 = vcvt.s32.f32 %v195
        %v200 = vcvt.s32.f32 %v196
        %v201 = vcvt.s32.f32 %v197
        %v202 = vcvt.s32.f32 %v198
        %vm203 = vcmp.eq.f32.partialorder %v185, %v193
        %vm204 = vcmp.eq.f32.partialorder %v186, %v193
        %vm205 = vcmp.eq.f32.partialorder %v187, %v193
        %vm206 = vcmp.eq.f32.partialorder %v188, %v193
        %v207 = vsel %vm203, %v199, 512.0
        %v208 = vsel %vm204, %v200, 512.0
        %v209 = vsel %vm205, %v201, 512.0
        %v210 = vsel %vm206, %v202, 512.0
        %v211 = vmin.f32 %v207, %v208
        %v212 = vmin.f32 %v209, %v210
        %v213 = vmin.f32 %v211, %v212
        %214 = vmin.xlane.f32.xlu0 %v213
        %v215 = vpop.xlane.xlu0 %214
        %vm216 = vcmp.eq.f32.partialorder %v199, %v215
        %vm217 = vcmp.eq.f32.partialorder %v200, %v215
        %vm218 = vcmp.eq.f32.partialorder %v201, %v215
        %vm219 = vcmp.eq.f32.partialorder %v202, %v215
        %v220 = vsel %vm216, 1, 0
        %v221 = vsel %vm217, 1, 0
        %v222 = vsel %vm218, 1, 0
        %v223 = vsel %vm219, 1, 0
        %v224 = vcvt.s32.f32 %v220
        %v225 = vcvt.s32.f32 %v221
        %v226 = vcvt.s32.f32 %v222
        %v227 = vcvt.s32.f32 %v223
        %v228 = vld [vmem:[%s2] sm:$0xff]
        %v229 = vld [vmem:[%s2 + $0x8] sm:$0xff]
        %v230 = vld [vmem:[%s2 + $0x10] sm:$0xff]
        %v231 = vld [vmem:[%s2 + $0x18] sm:$0xff]
        %v232 = vld [vmem:[%s2 + $0x20] sm:$0xff]
        %v233 = vld [vmem:[%s2 + $0x28] sm:$0xff]
        %v234 = vld [vmem:[%s2 + $0x30] sm:$0xff]
        %v235 = vld [vmem:[%s2 + $0x38] sm:$0xff]
        %v236 = vld [vmem:[%s2 + $0x40] sm:$0xff]
        %v237 = vld [vmem:[%s2 + $0x48] sm:$0xff]
        %v238 = vld [vmem:[%s2 + $0x50] sm:$0xff]
        %v239 = vld [vmem:[%s2 + $0x58] sm:$0xff]
        %v240 = vld [vmem:[%s2 + $0x60] sm:$0xff]
        %v241 = vld [vmem:[%s2 + $0x68] sm:$0xff]
        %v242 = vld [vmem:[%s2 + $0x70] sm:$0xff]
        %v243 = vld [vmem:[%s2 + $0x78] sm:$0xff]
        %v244 = vld [vmem:[%s2 + $0x80] sm:$0xff]
        %v245 = vld [vmem:[%s2 + $0x88] sm:$0xff]
        %v246 = vld [vmem:[%s2 + $0x90] sm:$0xff]
        %v247 = vld [vmem:[%s2 + $0x98] sm:$0xff]
        %v248 = vld [vmem:[%s2 + $0xa0] sm:$0xff]
        %v249 = vld [vmem:[%s2 + $0xa8] sm:$0xff]
        %v250 = vld [vmem:[%s2 + $0xb0] sm:$0xff]
        %v251 = vld [vmem:[%s2 + $0xb8] sm:$0xff]
        %v252 = vld [vmem:[%s2 + $0xc0] sm:$0xff]
        %v253 = vld [vmem:[%s2 + $0xc8] sm:$0xff]
        %v254 = vld [vmem:[%s2 + $0xd0] sm:$0xff]
        %v255 = vld [vmem:[%s2 + $0xd8] sm:$0xff]
        %v256 = vld [vmem:[%s2 + $0xe0] sm:$0xff]
        %v257 = vld [vmem:[%s2 + $0xe8] sm:$0xff]
        %v258 = vld [vmem:[%s2 + $0xf0] sm:$0xff]
        %v259 = vld [vmem:[%s2 + $0xf8] sm:$0xff]
        %v260 = vld [vmem:[%s2 + $0x100] sm:$0xff]
        %v261 = vld [vmem:[%s2 + $0x108] sm:$0xff]
        %v262 = vld [vmem:[%s2 + $0x110] sm:$0xff]
        %v263 = vld [vmem:[%s2 + $0x118] sm:$0xff]
        %v264 = vld [vmem:[%s2 + $0x120] sm:$0xff]
        %v265 = vld [vmem:[%s2 + $0x128] sm:$0xff]
        %v266 = vld [vmem:[%s2 + $0x130] sm:$0xff]
        %v267 = vld [vmem:[%s2 + $0x138] sm:$0xff]
        %v268 = vld [vmem:[%s2 + $0x140] sm:$0xff]
        %v269 = vld [vmem:[%s2 + $0x148] sm:$0xff]
        %v270 = vld [vmem:[%s2 + $0x150] sm:$0xff]
        %v271 = vld [vmem:[%s2 + $0x158] sm:$0xff]
        %v272 = vld [vmem:[%s2 + $0x160] sm:$0xff]
        %v273 = vld [vmem:[%s2 + $0x168] sm:$0xff]
        %v274 = vld [vmem:[%s2 + $0x170] sm:$0xff]
        %v275 = vld [vmem:[%s2 + $0x178] sm:$0xff]
        %v276 = vld [vmem:[%s2 + $0x180] sm:$0xff]
        %v277 = vld [vmem:[%s2 + $0x188] sm:$0xff]
        %v278 = vld [vmem:[%s2 + $0x190] sm:$0xff]
        %v279 = vld [vmem:[%s2 + $0x198] sm:$0xff]
        %v280 = vld [vmem:[%s2 + $0x1a0] sm:$0xff]
        %v281 = vld [vmem:[%s2 + $0x1a8] sm:$0xff]
        %v282 = vld [vmem:[%s2 + $0x1b0] sm:$0xff]
        %v283 = vld [vmem:[%s2 + $0x1b8] sm:$0xff]
        %v284 = vld [vmem:[%s2 + $0x1c0] sm:$0xff]
        %v285 = vld [vmem:[%s2 + $0x1c8] sm:$0xff]
        %v286 = vld [vmem:[%s2 + $0x1d0] sm:$0xff]
        %v287 = vld [vmem:[%s2 + $0x1d8] sm:$0xff]
        %v288 = vld [vmem:[%s2 + $0x1e0] sm:$0xff]
        %v289 = vld [vmem:[%s2 + $0x1e8] sm:$0xff]
        %v290 = vld [vmem:[%s2 + $0x1f0] sm:$0xff]
        %v291 = vld [vmem:[%s2 + $0x1f8] sm:$0xff]
        %292 = vmatprep.subr.mxu0 0.0
        %v293 = vand.u32 %v228, 4294901760
        %294 = vmatpush1.msra.mxu0 %v293
        %295 = vmatprep.subr.mxu0 0.0
        %v296 = vand.u32 %v229, 4294901760
        %297 = vmatpush1.msra.mxu0 %v296
        %298 = vmatprep.subr.mxu0 0.0
        %v299 = vand.u32 %v230, 4294901760
        %300 = vmatpush1.msra.mxu0 %v299
        %301 = vmatprep.subr.mxu0 0.0
        %v302 = vand.u32 %v231, 4294901760
        %303 = vmatpush1.msra.mxu0 %v302
        %304 = vmatprep.subr.mxu0 0.0
        %v305 = vand.u32 %v232, 4294901760
        %306 = vmatpush1.msra.mxu0 %v305
        %307 = vmatprep.subr.mxu0 0.0
        %v308 = vand.u32 %v233, 4294901760
        %309 = vmatpush1.msra.mxu0 %v308
        %310 = vmatprep.subr.mxu0 0.0
        %v311 = vand.u32 %v234, 4294901760
        %312 = vmatpush1.msra.mxu0 %v311
        %313 = vmatprep.subr.mxu0 0.0
        %v314 = vand.u32 %v235, 4294901760
        %315 = vmatpush1.msra.mxu0 %v314
        %316 = vmatprep.subr.mxu0 0.0
        %v317 = vand.u32 %v236, 4294901760
        %318 = vmatpush1.msra.mxu0 %v317
        %319 = vmatprep.subr.mxu0 0.0
        %v320 = vand.u32 %v237, 4294901760
        %321 = vmatpush1.msra.mxu0 %v320
        %322 = vmatprep.subr.mxu0 0.0
        %v323 = vand.u32 %v238, 4294901760
        %324 = vmatpush1.msra.mxu0 %v323
        %325 = vmatprep.subr.mxu0 0.0
        %v326 = vand.u32 %v239, 4294901760
        %327 = vmatpush1.msra.mxu0 %v326
        %328 = vmatprep.subr.mxu0 0.0
        %v329 = vand.u32 %v240, 4294901760
        %330 = vmatpush1.msra.mxu0 %v329
        %331 = vmatprep.subr.mxu0 0.0
        %v332 = vand.u32 %v241, 4294901760
        %333 = vmatpush1.msra.mxu0 %v332
        %334 = vmatprep.subr.mxu0 0.0
        %v335 = vand.u32 %v242, 4294901760
        %336 = vmatpush1.msra.mxu0 %v335
        %337 = vmatprep.subr.mxu0 0.0
        %v338 = vand.u32 %v243, 4294901760
        %339 = vmatpush1.msra.mxu0 %v338
        %340 = vmatprep.subr.mxu0 0.0
        %v341 = vand.u32 %v244, 4294901760
        %342 = vmatpush1.msra.mxu0 %v341
        %343 = vmatprep.subr.mxu0 0.0
        %v344 = vand.u32 %v245, 4294901760
        %345 = vmatpush1.msra.mxu0 %v344
        %346 = vmatprep.subr.mxu0 0.0
        %v347 = vand.u32 %v246, 4294901760
        %348 = vmatpush1.msra.mxu0 %v347
        %349 = vmatprep.subr.mxu0 0.0
        %v350 = vand.u32 %v247, 4294901760
        %351 = vmatpush1.msra.mxu0 %v350
        %352 = vmatprep.subr.mxu0 0.0
        %v353 = vand.u32 %v248, 4294901760
        %354 = vmatpush1.msra.mxu0 %v353
        %355 = vmatprep.subr.mxu0 0.0
        %v356 = vand.u32 %v249, 4294901760
        %357 = vmatpush1.msra.mxu0 %v356
        %358 = vmatprep.subr.mxu0 0.0
        %v359 = vand.u32 %v250, 4294901760
        %360 = vmatpush1.msra.mxu0 %v359
        %361 = vmatprep.subr.mxu0 0.0
        %v362 = vand.u32 %v251, 4294901760
        %363 = vmatpush1.msra.mxu0 %v362
        %364 = vmatprep.subr.mxu0 0.0
        %v365 = vand.u32 %v252, 4294901760
        %366 = vmatpush1.msra.mxu0 %v365
        %367 = vmatprep.subr.mxu0 0.0
        %v368 = vand.u32 %v253, 4294901760
        %369 = vmatpush1.msra.mxu0 %v368
        %370 = vmatprep.subr.mxu0 0.0
        %v371 = vand.u32 %v254, 4294901760
        %372 = vmatpush1.msra.mxu0 %v371
        %373 = vmatprep.subr.mxu0 0.0
        %v374 = vand.u32 %v255, 4294901760
        %375 = vmatpush1.msra.mxu0 %v374
        %376 = vmatprep.subr.mxu0 0.0
        %v377 = vand.u32 %v256, 4294901760
        %378 = vmatpush1.msra.mxu0 %v377
        %379 = vmatprep.subr.mxu0 0.0
        %v380 = vand.u32 %v257, 4294901760
        %381 = vmatpush1.msra.mxu0 %v380
        %382 = vmatprep.subr.mxu0 0.0
        %v383 = vand.u32 %v258, 4294901760
        %384 = vmatpush1.msra.mxu0 %v383
        %385 = vmatprep.subr.mxu0 0.0
        %v386 = vand.u32 %v259, 4294901760
        %387 = vmatpush1.msra.mxu0 %v386
        %v388 = vand.u32 %v225, 4294901760
        %v389 = vsub.f32 %v225, %v388
        %v390 = vand.u32 %v389, 4294901760
        %v391 = vsub.f32 %v389, %v390
        %v392 = vand.u32 %v391, 4294901760
        %393 = vmatprep.mubr.f32.mxu0 %v392
        %v394 = vand.u32 %v224, 4294901760
        %v395 = vsub.f32 %v224, %v394
        %v396 = vand.u32 %v395, 4294901760
        %v397 = vsub.f32 %v395, %v396
        %v398 = vand.u32 %v397, 4294901760
        %399 = vmatmul.mubr.f32.gmra.mrb[0].mxu0 %v398
        %v400 = vpop.f32.mrb[0].mxu0
        %v401 = vadd.f32 0.0, %v400
        %v402 = vpop.f32.mrb[0].mxu0
        %403 = vdwg.mxu0
        %404 = vmatprep.subr.mxu0 0.0
        %v405 = vand.u32 %v228, 4294901760
        %v406 = vsub.f32 %v228, %v405
        %v407 = vand.u32 %v406, 4294901760
        %v408 = vsub.f32 %v406, %v407
        %v409 = vand.u32 %v408, 4294901760
        %410 = vmatpush1.msra.mxu0 %v409
        %411 = vmatprep.subr.mxu0 0.0
        %v412 = vand.u32 %v229, 4294901760
        %v413 = vsub.f32 %v229, %v412
        %v414 = vand.u32 %v413, 4294901760
        %v415 = vsub.f32 %v413, %v414
        %v416 = vand.u32 %v415, 4294901760
        %417 = vmatpush1.msra.mxu0 %v416
        %418 = vmatprep.subr.mxu0 0.0
        %v419 = vand.u32 %v230, 4294901760
        %v420 = vsub.f32 %v230, %v419
        %v421 = vand.u32 %v420, 4294901760
        %v422 = vsub.f32 %v420, %v421
        %v423 = vand.u32 %v422, 4294901760
        %424 = vmatpush1.msra.mxu0 %v423
        %425 = vmatprep.subr.mxu0 0.0
        %v426 = vand.u32 %v231, 4294901760
        %v427 = vsub.f32 %v231, %v426
        %v428 = vand.u32 %v427, 4294901760
        %v429 = vsub.f32 %v427, %v428
        %v430 = vand.u32 %v429, 4294901760
        %431 = vmatpush1.msra.mxu0 %v430
        %432 = vmatprep.subr.mxu0 0.0
        %v433 = vand.u32 %v232, 4294901760
        %v434 = vsub.f32 %v232, %v433
        %v435 = vand.u32 %v434, 4294901760
        %v436 = vsub.f32 %v434, %v435
        %v437 = vand.u32 %v436, 4294901760
        %438 = vmatpush1.msra.mxu0 %v437
        %439 = vmatprep.subr.mxu0 0.0
        %v440 = vand.u32 %v233, 4294901760
        %v441 = vsub.f32 %v233, %v440
        %v442 = vand.u32 %v441, 4294901760
        %v443 = vsub.f32 %v441, %v442
        %v444 = vand.u32 %v443, 4294901760
        %445 = vmatpush1.msra.mxu0 %v444
        %446 = vmatprep.subr.mxu0 0.0
        %v447 = vand.u32 %v234, 4294901760
        %v448 = vsub.f32 %v234, %v447
        %v449 = vand.u32 %v448, 4294901760
        %v450 = vsub.f32 %v448, %v449
        %v451 = vand.u32 %v450, 4294901760
        %452 = vmatpush1.msra.mxu0 %v451
        %453 = vmatprep.subr.mxu0 0.0
        %v454 = vand.u32 %v235, 4294901760
        %v455 = vsub.f32 %v235, %v454
        %v456 = vand.u32 %v455, 4294901760
        %v457 = vsub.f32 %v455, %v456
        %v458 = vand.u32 %v457, 4294901760
        %459 = vmatpush1.msra.mxu0 %v458
        %460 = vmatprep.subr.mxu0 0.0
        %v461 = vand.u32 %v236, 4294901760
        %v462 = vsub.f32 %v236, %v461
        %v463 = vand.u32 %v462, 4294901760
        %v464 = vsub.f32 %v462, %v463
        %v465 = vand.u32 %v464, 4294901760
        %466 = vmatpush1.msra.mxu0 %v465
        %467 = vmatprep.subr.mxu0 0.0
        %v468 = vand.u32 %v237, 4294901760
        %v469 = vsub.f32 %v237, %v468
        %v470 = vand.u32 %v469, 4294901760
        %v471 = vsub.f32 %v469, %v470
        %v472 = vand.u32 %v471, 4294901760
        %473 = vmatpush1.msra.mxu0 %v472
        %474 = vmatprep.subr.mxu0 0.0
        %v475 = vand.u32 %v238, 4294901760
        %v476 = vsub.f32 %v238, %v475
        %v477 = vand.u32 %v476, 4294901760
        %v478 = vsub.f32 %v476, %v477
        %v479 = vand.u32 %v478, 4294901760
        %480 = vmatpush1.msra.mxu0 %v479
        %481 = vmatprep.subr.mxu0 0.0
        %v482 = vand.u32 %v239, 4294901760
        %v483 = vsub.f32 %v239, %v482
        %v484 = vand.u32 %v483, 4294901760
        %v485 = vsub.f32 %v483, %v484
        %v486 = vand.u32 %v485, 4294901760
        %487 = vmatpush1.msra.mxu0 %v486
        %488 = vmatprep.subr.mxu0 0.0
        %v489 = vand.u32 %v240, 4294901760
        %v490 = vsub.f32 %v240, %v489
        %v491 = vand.u32 %v490, 4294901760
        %v492 = vsub.f32 %v490, %v491
        %v493 = vand.u32 %v492, 4294901760
        %494 = vmatpush1.msra.mxu0 %v493
        %495 = vmatprep.subr.mxu0 0.0
        %v496 = vand.u32 %v241, 4294901760
        %v497 = vsub.f32 %v241, %v496
        %v498 = vand.u32 %v497, 4294901760
        %v499 = vsub.f32 %v497, %v498
        %v500 = vand.u32 %v499, 4294901760
        %501 = vmatpush1.msra.mxu0 %v500
        %502 = vmatprep.subr.mxu0 0.0
        %v503 = vand.u32 %v242, 4294901760
        %v504 = vsub.f32 %v242, %v503
        %v505 = vand.u32 %v504, 4294901760
        %v506 = vsub.f32 %v504, %v505
        %v507 = vand.u32 %v506, 4294901760
        %508 = vmatpush1.msra.mxu0 %v507
        %509 = vmatprep.subr.mxu0 0.0
        %v510 = vand.u32 %v243, 4294901760
        %v511 = vsub.f32 %v243, %v510
        %v512 = vand.u32 %v511, 4294901760
        %v513 = vsub.f32 %v511, %v512
        %v514 = vand.u32 %v513, 4294901760
        %515 = vmatpush1.msra.mxu0 %v514
        %516 = vmatprep.subr.mxu0 0.0
        %v517 = vand.u32 %v244, 4294901760
        %v518 = vsub.f32 %v244, %v517
        %v519 = vand.u32 %v518, 4294901760
        %v520 = vsub.f32 %v518, %v519
        %v521 = vand.u32 %v520, 4294901760
        %522 = vmatpush1.msra.mxu0 %v521
        %523 = vmatprep.subr.mxu0 0.0
        %v524 = vand.u32 %v245, 4294901760
        %v525 = vsub.f32 %v245, %v524
        %v526 = vand.u32 %v525, 4294901760
        %v527 = vsub.f32 %v525, %v526
        %v528 = vand.u32 %v527, 4294901760
        %529 = vmatpush1.msra.mxu0 %v528
        %530 = vmatprep.subr.mxu0 0.0
        %v531 = vand.u32 %v246, 4294901760
        %v532 = vsub.f32 %v246, %v531
        %v533 = vand.u32 %v532, 4294901760
        %v534 = vsub.f32 %v532, %v533
        %v535 = vand.u32 %v534, 4294901760
        %536 = vmatpush1.msra.mxu0 %v535
        %537 = vmatprep.subr.mxu0 0.0
        %v538 = vand.u32 %v247, 4294901760
        %v539 = vsub.f32 %v247, %v538
        %v540 = vand.u32 %v539, 4294901760
        %v541 = vsub.f32 %v539, %v540
        %v542 = vand.u32 %v541, 4294901760
        %543 = vmatpush1.msra.mxu0 %v542
        %544 = vmatprep.subr.mxu0 0.0
        %v545 = vand.u32 %v248, 4294901760
        %v546 = vsub.f32 %v248, %v545
        %v547 = vand.u32 %v546, 4294901760
        %v548 = vsub.f32 %v546, %v547
        %v549 = vand.u32 %v548, 4294901760
        %550 = vmatpush1.msra.mxu0 %v549
        %551 = vmatprep.subr.mxu0 0.0
        %v552 = vand.u32 %v249, 4294901760
        %v553 = vsub.f32 %v249, %v552
        %v554 = vand.u32 %v553, 4294901760
        %v555 = vsub.f32 %v553, %v554
        %v556 = vand.u32 %v555, 4294901760
        %557 = vmatpush1.msra.mxu0 %v556
        %558 = vmatprep.subr.mxu0 0.0
        %v559 = vand.u32 %v250, 4294901760
        %v560 = vsub.f32 %v250, %v559
        %v561 = vand.u32 %v560, 4294901760
        %v562 = vsub.f32 %v560, %v561
        %v563 = vand.u32 %v562, 4294901760
        %564 = vmatpush1.msra.mxu0 %v563
        %565 = vmatprep.subr.mxu0 0.0
        %v566 = vand.u32 %v251, 4294901760
        %v567 = vsub.f32 %v251, %v566
        %v568 = vand.u32 %v567, 4294901760
        %v569 = vsub.f32 %v567, %v568
        %v570 = vand.u32 %v569, 4294901760
        %571 = vmatpush1.msra.mxu0 %v570
        %572 = vmatprep.subr.mxu0 0.0
        %v573 = vand.u32 %v252, 4294901760
        %v574 = vsub.f32 %v252, %v573
        %v575 = vand.u32 %v574, 4294901760
        %v576 = vsub.f32 %v574, %v575
        %v577 = vand.u32 %v576, 4294901760
        %578 = vmatpush1.msra.mxu0 %v577
        %579 = vmatprep.subr.mxu0 0.0
        %v580 = vand.u32 %v253, 4294901760
        %v581 = vsub.f32 %v253, %v580
        %v582 = vand.u32 %v581, 4294901760
        %v583 = vsub.f32 %v581, %v582
        %v584 = vand.u32 %v583, 4294901760
        %585 = vmatpush1.msra.mxu0 %v584
        %586 = vmatprep.subr.mxu0 0.0
        %v587 = vand.u32 %v254, 4294901760
        %v588 = vsub.f32 %v254, %v587
        %v589 = vand.u32 %v588, 4294901760
        %v590 = vsub.f32 %v588, %v589
        %v591 = vand.u32 %v590, 4294901760
        %592 = vmatpush1.msra.mxu0 %v591
        %593 = vmatprep.subr.mxu0 0.0
        %v594 = vand.u32 %v255, 4294901760
        %v595 = vsub.f32 %v255, %v594
        %v596 = vand.u32 %v595, 4294901760
        %v597 = vsub.f32 %v595, %v596
        %v598 = vand.u32 %v597, 4294901760
        %599 = vmatpush1.msra.mxu0 %v598
        %600 = vmatprep.subr.mxu0 0.0
        %v601 = vand.u32 %v256, 4294901760
        %v602 = vsub.f32 %v256, %v601
        %v603 = vand.u32 %v602, 4294901760
        %v604 = vsub.f32 %v602, %v603
        %v605 = vand.u32 %v604, 4294901760
        %606 = vmatpush1.msra.mxu0 %v605
        %607 = vmatprep.subr.mxu0 0.0
        %v608 = vand.u32 %v257, 4294901760
        %v609 = vsub.f32 %v257, %v608
        %v610 = vand.u32 %v609, 4294901760
        %v611 = vsub.f32 %v609, %v610
        %v612 = vand.u32 %v611, 4294901760
        %613 = vmatpush1.msra.mxu0 %v612
        %614 = vmatprep.subr.mxu0 0.0
        %v615 = vand.u32 %v258, 4294901760
        %v616 = vsub.f32 %v258, %v615
        %v617 = vand.u32 %v616, 4294901760
        %v618 = vsub.f32 %v616, %v617
        %v619 = vand.u32 %v618, 4294901760
        %620 = vmatpush1.msra.mxu0 %v619
        %621 = vmatprep.subr.mxu0 0.0
        %v622 = vand.u32 %v259, 4294901760
        %v623 = vsub.f32 %v259, %v622
        %v624 = vand.u32 %v623, 4294901760
        %v625 = vsub.f32 %v623, %v624
        %v626 = vand.u32 %v625, 4294901760
        %627 = vmatpush1.msra.mxu0 %v626
        %v628 = vand.u32 %v225, 4294901760
        %629 = vmatprep.mubr.f32.mxu0 %v628
        %v630 = vand.u32 %v224, 4294901760
        %631 = vmatmul.mubr.f32.gmra.mrb[0].mxu0 %v630
        %v632 = vpop.f32.mrb[0].mxu0
        %v633 = vadd.f32 %v401, %v632
        %v634 = vpop.f32.mrb[0].mxu0
        %635 = vdwg.mxu0
        %636 = vmatprep.subr.mxu0 0.0
        %v637 = vand.u32 %v228, 4294901760
        %v638 = vsub.f32 %v228, %v637
        %639 = vmatpush1.msra.mxu0 %v638
        %640 = vmatprep.subr.mxu0 0.0
        %v641 = vand.u32 %v229, 4294901760
        %v642 = vsub.f32 %v229, %v641
        %643 = vmatpush1.msra.mxu0 %v642
        %644 = vmatprep.subr.mxu0 0.0
        %v645 = vand.u32 %v230, 4294901760
        %v646 = vsub.f32 %v230, %v645
        %647 = vmatpush1.msra.mxu0 %v646
        %648 = vmatprep.subr.mxu0 0.0
        %v649 = vand.u32 %v231, 4294901760
        %v650 = vsub.f32 %v231, %v649
        %651 = vmatpush1.msra.mxu0 %v650
        %652 = vmatprep.subr.mxu0 0.0
        %v653 = vand.u32 %v232, 4294901760
        %v654 = vsub.f32 %v232, %v653
        %655 = vmatpush1.msra.mxu0 %v654
        %656 = vmatprep.subr.mxu0 0.0
        %v657 = vand.u32 %v233, 4294901760
        %v658 = vsub.f32 %v233, %v657
        %659 = vmatpush1.msra.mxu0 %v658
        %660 = vmatprep.subr.mxu0 0.0
        %v661 = vand.u32 %v234, 4294901760
        %v662 = vsub.f32 %v234, %v661
        %663 = vmatpush1.msra.mxu0 %v662
        %664 = vmatprep.subr.mxu0 0.0
        %v665 = vand.u32 %v235, 4294901760
        %v666 = vsub.f32 %v235, %v665
        %667 = vmatpush1.msra.mxu0 %v666
        %668 = vmatprep.subr.mxu0 0.0
        %v669 = vand.u32 %v236, 4294901760
        %v670 = vsub.f32 %v236, %v669
        %671 = vmatpush1.msra.mxu0 %v670
        %672 = vmatprep.subr.mxu0 0.0
        %v673 = vand.u32 %v237, 4294901760
        %v674 = vsub.f32 %v237, %v673
        %675 = vmatpush1.msra.mxu0 %v674
        %676 = vmatprep.subr.mxu0 0.0
        %v677 = vand.u32 %v238, 4294901760
        %v678 = vsub.f32 %v238, %v677
        %679 = vmatpush1.msra.mxu0 %v678
        %680 = vmatprep.subr.mxu0 0.0
        %v681 = vand.u32 %v239, 4294901760
        %v682 = vsub.f32 %v239, %v681
        %683 = vmatpush1.msra.mxu0 %v682
        %684 = vmatprep.subr.mxu0 0.0
        %v685 = vand.u32 %v240, 4294901760
        %v686 = vsub.f32 %v240, %v685
        %687 = vmatpush1.msra.mxu0 %v686
        %688 = vmatprep.subr.mxu0 0.0
        %v689 = vand.u32 %v241, 4294901760
        %v690 = vsub.f32 %v241, %v689
        %691 = vmatpush1.msra.mxu0 %v690
        %692 = vmatprep.subr.mxu0 0.0
        %v693 = vand.u32 %v242, 4294901760
        %v694 = vsub.f32 %v242, %v693
        %695 = vmatpush1.msra.mxu0 %v694
        %696 = vmatprep.subr.mxu0 0.0
        %v697 = vand.u32 %v243, 4294901760
        %v698 = vsub.f32 %v243, %v697
        %699 = vmatpush1.msra.mxu0 %v698
        %700 = vmatprep.subr.mxu0 0.0
        %v701 = vand.u32 %v244, 4294901760
        %v702 = vsub.f32 %v244, %v701
        %703 = vmatpush1.msra.mxu0 %v702
        %704 = vmatprep.subr.mxu0 0.0
        %v705 = vand.u32 %v245, 4294901760
        %v706 = vsub.f32 %v245, %v705
        %707 = vmatpush1.msra.mxu0 %v706
        %708 = vmatprep.subr.mxu0 0.0
        %v709 = vand.u32 %v246, 4294901760
        %v710 = vsub.f32 %v246, %v709
        %711 = vmatpush1.msra.mxu0 %v710
        %712 = vmatprep.subr.mxu0 0.0
        %v713 = vand.u32 %v247, 4294901760
        %v714 = vsub.f32 %v247, %v713
        %715 = vmatpush1.msra.mxu0 %v714
        %716 = vmatprep.subr.mxu0 0.0
        %v717 = vand.u32 %v248, 4294901760
        %v718 = vsub.f32 %v248, %v717
        %719 = vmatpush1.msra.mxu0 %v718
        %720 = vmatprep.subr.mxu0 0.0
        %v721 = vand.u32 %v249, 4294901760
        %v722 = vsub.f32 %v249, %v721
        %723 = vmatpush1.msra.mxu0 %v722
        %724 = vmatprep.subr.mxu0 0.0
        %v725 = vand.u32 %v250, 4294901760
        %v726 = vsub.f32 %v250, %v725
        %727 = vmatpush1.msra.mxu0 %v726
        %728 = vmatprep.subr.mxu0 0.0
        %v729 = vand.u32 %v251, 4294901760
        %v730 = vsub.f32 %v251, %v729
        %731 = vmatpush1.msra.mxu0 %v730
        %732 = vmatprep.subr.mxu0 0.0
        %v733 = vand.u32 %v252, 4294901760
        %v734 = vsub.f32 %v252, %v733
        %735 = vmatpush1.msra.mxu0 %v734
        %736 = vmatprep.subr.mxu0 0.0
        %v737 = vand.u32 %v253, 4294901760
        %v738 = vsub.f32 %v253, %v737
        %739 = vmatpush1.msra.mxu0 %v738
        %740 = vmatprep.subr.mxu0 0.0
        %v741 = vand.u32 %v254, 4294901760
        %v742 = vsub.f32 %v254, %v741
        %743 = vmatpush1.msra.mxu0 %v742
        %744 = vmatprep.subr.mxu0 0.0
        %v745 = vand.u32 %v255, 4294901760
        %v746 = vsub.f32 %v255, %v745
        %747 = vmatpush1.msra.mxu0 %v746
        %748 = vmatprep.subr.mxu0 0.0
        %v749 = vand.u32 %v256, 4294901760
        %v750 = vsub.f32 %v256, %v749
        %751 = vmatpush1.msra.mxu0 %v750
        %752 = vmatprep.subr.mxu0 0.0
        %v753 = vand.u32 %v257, 4294901760
        %v754 = vsub.f32 %v257, %v753
        %755 = vmatpush1.msra.mxu0 %v754
        %756 = vmatprep.subr.mxu0 0.0
        %v757 = vand.u32 %v258, 4294901760
        %v758 = vsub.f32 %v258, %v757
        %759 = vmatpush1.msra.mxu0 %v758
        %760 = vmatprep.subr.mxu0 0.0
        %v761 = vand.u32 %v259, 4294901760
        %v762 = vsub.f32 %v259, %v761
        %763 = vmatpush1.msra.mxu0 %v762
        %v764 = vand.u32 %v225, 4294901760
        %v765 = vsub.f32 %v225, %v764
        %766 = vmatprep.mubr.f32.mxu0 %v765
        %v767 = vand.u32 %v224, 4294901760
        %v768 = vsub.f32 %v224, %v767
        %769 = vmatmul.mubr.f32.gmra.mrb[0].mxu0 %v768
        %v770 = vpop.f32.mrb[0].mxu0
        %v771 = vadd.f32 %v633, %v770
        %v772 = vpop.f32.mrb[0].mxu0
        %773 = vdwg.mxu0
        %774 = vmatprep.subr.mxu0 0.0
        %v775 = vand.u32 %v228, 4294901760
        %776 = vmatpush1.msra.mxu0 %v775
        %777 = vmatprep.subr.mxu0 0.0
        %v778 = vand.u32 %v229, 4294901760
        %779 = vmatpush1.msra.mxu0 %v778
        %780 = vmatprep.subr.mxu0 0.0
        %v781 = vand.u32 %v230, 4294901760
        %782 = vmatpush1.msra.mxu0 %v781
        %783 = vmatprep.subr.mxu0 0.0
        %v784 = vand.u32 %v231, 4294901760
        %785 = vmatpush1.msra.mxu0 %v784
        %786 = vmatprep.subr.mxu0 0.0
        %v787 = vand.u32 %v232, 4294901760
        %788 = vmatpush1.msra.mxu0 %v787
        %789 = vmatprep.subr.mxu0 0.0
        %v790 = vand.u32 %v233, 4294901760
        %791 = vmatpush1.msra.mxu0 %v790
        %792 = vmatprep.subr.mxu0 0.0
        %v793 = vand.u32 %v234, 4294901760
        %794 = vmatpush1.msra.mxu0 %v793
        %795 = vmatprep.subr.mxu0 0.0
        %v796 = vand.u32 %v235, 4294901760
        %797 = vmatpush1.msra.mxu0 %v796
        %798 = vmatprep.subr.mxu0 0.0
        %v799 = vand.u32 %v236, 4294901760
        %800 = vmatpush1.msra.mxu0 %v799
        %801 = vmatprep.subr.mxu0 0.0
        %v802 = vand.u32 %v237, 4294901760
        %803 = vmatpush1.msra.mxu0 %v802
        %804 = vmatprep.subr.mxu0 0.0
        %v805 = vand.u32 %v238, 4294901760
        %806 = vmatpush1.msra.mxu0 %v805
        %807 = vmatprep.subr.mxu0 0.0
        %v808 = vand.u32 %v239, 4294901760
        %809 = vmatpush1.msra.mxu0 %v808
        %810 = vmatprep.subr.mxu0 0.0
        %v811 = vand.u32 %v240, 4294901760
        %812 = vmatpush1.msra.mxu0 %v811
        %813 = vmatprep.subr.mxu0 0.0
        %v814 = vand.u32 %v241, 4294901760
        %815 = vmatpush1.msra.mxu0 %v814
        %816 = vmatprep.subr.mxu0 0.0
        %v817 = vand.u32 %v242, 4294901760
        %818 = vmatpush1.msra.mxu0 %v817
        %819 = vmatprep.subr.mxu0 0.0
        %v820 = vand.u32 %v243, 4294901760
        %821 = vmatpush1.msra.mxu0 %v820
        %822 = vmatprep.subr.mxu0 0.0
        %v823 = vand.u32 %v244, 4294901760
        %824 = vmatpush1.msra.mxu0 %v823
        %825 = vmatprep.subr.mxu0 0.0
        %v826 = vand.u32 %v245, 4294901760
        %827 = vmatpush1.msra.mxu0 %v826
        %828 = vmatprep.subr.mxu0 0.0
        %v829 = vand.u32 %v246, 4294901760
        %830 = vmatpush1.msra.mxu0 %v829
        %831 = vmatprep.subr.mxu0 0.0
        %v832 = vand.u32 %v247, 4294901760
        %833 = vmatpush1.msra.mxu0 %v832
        %834 = vmatprep.subr.mxu0 0.0
        %v835 = vand.u32 %v248, 4294901760
        %836 = vmatpush1.msra.mxu0 %v835
        %837 = vmatprep.subr.mxu0 0.0
        %v838 = vand.u32 %v249, 4294901760
        %839 = vmatpush1.msra.mxu0 %v838
        %840 = vmatprep.subr.mxu0 0.0
        %v841 = vand.u32 %v250, 4294901760
        %842 = vmatpush1.msra.mxu0 %v841
        %843 = vmatprep.subr.mxu0 0.0
        %v844 = vand.u32 %v251, 4294901760
        %845 = vmatpush1.msra.mxu0 %v844
        %846 = vmatprep.subr.mxu0 0.0
        %v847 = vand.u32 %v252, 4294901760
        %848 = vmatpush1.msra.mxu0 %v847
        %849 = vmatprep.subr.mxu0 0.0
        %v850 = vand.u32 %v253, 4294901760
        %851 = vmatpush1.msra.mxu0 %v850
        %852 = vmatprep.subr.mxu0 0.0
        %v853 = vand.u32 %v254, 4294901760
        %854 = vmatpush1.msra.mxu0 %v853
        %855 = vmatprep.subr.mxu0 0.0
        %v856 = vand.u32 %v255, 4294901760
        %857 = vmatpush1.msra.mxu0 %v856
        %858 = vmatprep.subr.mxu0 0.0
        %v859 = vand.u32 %v256, 4294901760
        %860 = vmatpush1.msra.mxu0 %v859
        %861 = vmatprep.subr.mxu0 0.0
        %v862 = vand.u32 %v257, 4294901760
        %863 = vmatpush1.msra.mxu0 %v862
        %864 = vmatprep.subr.mxu0 0.0
        %v865 = vand.u32 %v258, 4294901760
        %866 = vmatpush1.msra.mxu0 %v865
        %867 = vmatprep.subr.mxu0 0.0
        %v868 = vand.u32 %v259, 4294901760
        %869 = vmatpush1.msra.mxu0 %v868
        %v870 = vand.u32 %v225, 4294901760
        %v871 = vsub.f32 %v225, %v870
        %v872 = vand.u32 %v871, 4294901760
        %873 = vmatprep.mubr.f32.mxu0 %v872
        %v874 = vand.u32 %v224, 4294901760
        %v875 = vsub.f32 %v224, %v874
        %v876 = vand.u32 %v875, 4294901760
        %877 = vmatmul.mubr.f32.gmra.mrb[0].mxu0 %v876
        %v878 = vpop.f32.mrb[0].mxu0
        %v879 = vadd.f32 %v771, %v878
        %v880 = vpop.f32.mrb[0].mxu0
        %881 = vdwg.mxu0
        %882 = vmatprep.subr.mxu0 0.0
        %v883 = vand.u32 %v228, 4294901760
        %v884 = vsub.f32 %v228, %v883
        %v885 = vand.u32 %v884, 4294901760
        %886 = vmatpush1.msra.mxu0 %v885
        %887 = vmatprep.subr.mxu0 0.0
        %v888 = vand.u32 %v229, 4294901760
        %v889 = vsub.f32 %v229, %v888
        %v890 = vand.u32 %v889, 4294901760
        %891 = vmatpush1.msra.mxu0 %v890
        %892 = vmatprep.subr.mxu0 0.0
        %v893 = vand.u32 %v230, 4294901760
        %v894 = vsub.f32 %v230, %v893
        %v895 = vand.u32 %v894, 4294901760
        %896 = vmatpush1.msra.mxu0 %v895
        %897 = vmatprep.subr.mxu0 0.0
        %v898 = vand.u32 %v231, 4294901760
        %v899 = vsub.f32 %v231, %v898
        %v900 = vand.u32 %v899, 4294901760
        %901 = vmatpush1.msra.mxu0 %v900
        %902 = vmatprep.subr.mxu0 0.0
        %v903 = vand.u32 %v232, 4294901760
        %v904 = vsub.f32 %v232, %v903
        %v905 = vand.u32 %v904, 4294901760
        %906 = vmatpush1.msra.mxu0 %v905
        %907 = vmatprep.subr.mxu0 0.0
        %v908 = vand.u32 %v233, 4294901760
        %v909 = vsub.f32 %v233, %v908
        %v910 = vand.u32 %v909, 4294901760
        %911 = vmatpush1.msra.mxu0 %v910
        %912 = vmatprep.subr.mxu0 0.0
        %v913 = vand.u32 %v234, 4294901760
        %v914 = vsub.f32 %v234, %v913
        %v915 = vand.u32 %v914, 4294901760
        %916 = vmatpush1.msra.mxu0 %v915
        %917 = vmatprep.subr.mxu0 0.0
        %v918 = vand.u32 %v235, 4294901760
        %v919 = vsub.f32 %v235, %v918
        %v920 = vand.u32 %v919, 4294901760
        %921 = vmatpush1.msra.mxu0 %v920
        %922 = vmatprep.subr.mxu0 0.0
        %v923 = vand.u32 %v236, 4294901760
        %v924 = vsub.f32 %v236, %v923
        %v925 = vand.u32 %v924, 4294901760
        %926 = vmatpush1.msra.mxu0 %v925
        %927 = vmatprep.subr.mxu0 0.0
        %v928 = vand.u32 %v237, 4294901760
        %v929 = vsub.f32 %v237, %v928
        %v930 = vand.u32 %v929, 4294901760
        %931 = vmatpush1.msra.mxu0 %v930
        %932 = vmatprep.subr.mxu0 0.0
        %v933 = vand.u32 %v238, 4294901760
        %v934 = vsub.f32 %v238, %v933
        %v935 = vand.u32 %v934, 4294901760
        %936 = vmatpush1.msra.mxu0 %v935
        %937 = vmatprep.subr.mxu0 0.0
        %v938 = vand.u32 %v239, 4294901760
        %v939 = vsub.f32 %v239, %v938
        %v940 = vand.u32 %v939, 4294901760
        %941 = vmatpush1.msra.mxu0 %v940
        %942 = vmatprep.subr.mxu0 0.0
        %v943 = vand.u32 %v240, 4294901760
        %v944 = vsub.f32 %v240, %v943
        %v945 = vand.u32 %v944, 4294901760
        %946 = vmatpush1.msra.mxu0 %v945
        %947 = vmatprep.subr.mxu0 0.0
        %v948 = vand.u32 %v241, 4294901760
        %v949 = vsub.f32 %v241, %v948
        %v950 = vand.u32 %v949, 4294901760
        %951 = vmatpush1.msra.mxu0 %v950
        %952 = vmatprep.subr.mxu0 0.0
        %v953 = vand.u32 %v242, 4294901760
        %v954 = vsub.f32 %v242, %v953
        %v955 = vand.u32 %v954, 4294901760
        %956 = vmatpush1.msra.mxu0 %v955
        %957 = vmatprep.subr.mxu0 0.0
        %v958 = vand.u32 %v243, 4294901760
        %v959 = vsub.f32 %v243, %v958
        %v960 = vand.u32 %v959, 4294901760
        %961 = vmatpush1.msra.mxu0 %v960
        %962 = vmatprep.subr.mxu0 0.0
        %v963 = vand.u32 %v244, 4294901760
        %v964 = vsub.f32 %v244, %v963
        %v965 = vand.u32 %v964, 4294901760
        %966 = vmatpush1.msra.mxu0 %v965
        %967 = vmatprep.subr.mxu0 0.0
        %v968 = vand.u32 %v245, 4294901760
        %v969 = vsub.f32 %v245, %v968
        %v970 = vand.u32 %v969, 4294901760
        %971 = vmatpush1.msra.mxu0 %v970
        %972 = vmatprep.subr.mxu0 0.0
        %v973 = vand.u32 %v246, 4294901760
        %v974 = vsub.f32 %v246, %v973
        %v975 = vand.u32 %v974, 4294901760
        %976 = vmatpush1.msra.mxu0 %v975
        %977 = vmatprep.subr.mxu0 0.0
        %v978 = vand.u32 %v247, 4294901760
        %v979 = vsub.f32 %v247, %v978
        %v980 = vand.u32 %v979, 4294901760
        %981 = vmatpush1.msra.mxu0 %v980
        %982 = vmatprep.subr.mxu0 0.0
        %v983 = vand.u32 %v248, 4294901760
        %v984 = vsub.f32 %v248, %v983
        %v985 = vand.u32 %v984, 4294901760
        %986 = vmatpush1.msra.mxu0 %v985
        %987 = vmatprep.subr.mxu0 0.0
        %v988 = vand.u32 %v249, 4294901760
        %v989 = vsub.f32 %v249, %v988
        %v990 = vand.u32 %v989, 4294901760
        %991 = vmatpush1.msra.mxu0 %v990
        %992 = vmatprep.subr.mxu0 0.0
        %v993 = vand.u32 %v250, 4294901760
        %v994 = vsub.f32 %v250, %v993
        %v995 = vand.u32 %v994, 4294901760
        %996 = vmatpush1.msra.mxu0 %v995
        %997 = vmatprep.subr.mxu0 0.0
        %v998 = vand.u32 %v251, 4294901760
        %v999 = vsub.f32 %v251, %v998
        %v1000 = vand.u32 %v999, 4294901760
        %1001 = vmatpush1.msra.mxu0 %v1000
        %1002 = vmatprep.subr.mxu0 0.0
        %v1003 = vand.u32 %v252, 4294901760
        %v1004 = vsub.f32 %v252, %v1003
        %v1005 = vand.u32 %v1004, 4294901760
        %1006 = vmatpush1.msra.mxu0 %v1005
        %1007 = vmatprep.subr.mxu0 0.0
        %v1008 = vand.u32 %v253, 4294901760
        %v1009 = vsub.f32 %v253, %v1008
        %v1010 = vand.u32 %v1009, 4294901760
        %1011 = vmatpush1.msra.mxu0 %v1010
        %1012 = vmatprep.subr.mxu0 0.0
        %v1013 = vand.u32 %v254, 4294901760
        %v1014 = vsub.f32 %v254, %v1013
        %v1015 = vand.u32 %v1014, 4294901760
        %1016 = vmatpush1.msra.mxu0 %v1015
        %1017 = vmatprep.subr.mxu0 0.0
        %v1018 = vand.u32 %v255, 4294901760
        %v1019 = vsub.f32 %v255, %v1018
        %v1020 = vand.u32 %v1019, 4294901760
        %1021 = vmatpush1.msra.mxu0 %v1020
        %1022 = vmatprep.subr.mxu0 0.0
        %v1023 = vand.u32 %v256, 4294901760
        %v1024 = vsub.f32 %v256, %v1023
        %v1025 = vand.u32 %v1024, 4294901760
        %1026 = vmatpush1.msra.mxu0 %v1025
        %1027 = vmatprep.subr.mxu0 0.0
        %v1028 = vand.u32 %v257, 4294901760
        %v1029 = vsub.f32 %v257, %v1028
        %v1030 = vand.u32 %v1029, 4294901760
        %1031 = vmatpush1.msra.mxu0 %v1030
        %1032 = vmatprep.subr.mxu0 0.0
        %v1033 = vand.u32 %v258, 4294901760
        %v1034 = vsub.f32 %v258, %v1033
        %v1035 = vand.u32 %v1034, 4294901760
        %1036 = vmatpush1.msra.mxu0 %v1035
        %1037 = vmatprep.subr.mxu0 0.0
        %v1038 = vand.u32 %v259, 4294901760
        %v1039 = vsub.f32 %v259, %v1038
        %v1040 = vand.u32 %v1039, 4294901760
        %1041 = vmatpush1.msra.mxu0 %v1040
        %v1042 = vand.u32 %v225, 4294901760
        %1043 = vmatprep.mubr.f32.mxu0 %v1042
        %v1044 = vand.u32 %v224, 4294901760
        %1045 = vmatmul.mubr.f32.gmra.mrb[0].mxu0 %v1044
        %v1046 = vpop.f32.mrb[0].mxu0
        %v1047 = vadd.f32 %v879, %v1046
        %v1048 = vpop.f32.mrb[0].mxu0
        %1049 = vdwg.mxu0
        %1050 = vmatprep.subr.mxu0 0.0
        %v1051 = vand.u32 %v228, 4294901760
        %1052 = vmatpush1.msra.mxu0 %v1051
        %1053 = vmatprep.subr.mxu0 0.0
        %v1054 = vand.u32 %v229, 4294901760
        %1055 = vmatpush1.msra.mxu0 %v1054
        %1056 = vmatprep.subr.mxu0 0.0
        %v1057 = vand.u32 %v230, 4294901760
        %1058 = vmatpush1.msra.mxu0 %v1057
        %1059 = vmatprep.subr.mxu0 0.0
        %v1060 = vand.u32 %v231, 4294901760
        %1061 = vmatpush1.msra.mxu0 %v1060
        %1062 = vmatprep.subr.mxu0 0.0
        %v1063 = vand.u32 %v232, 4294901760
        %1064 = vmatpush1.msra.mxu0 %v1063
        %1065 = vmatprep.subr.mxu0 0.0
        %v1066 = vand.u32 %v233, 4294901760
        %1067 = vmatpush1.msra.mxu0 %v1066
        %1068 = vmatprep.subr.mxu0 0.0
        %v1069 = vand.u32 %v234, 4294901760
        %1070 = vmatpush1.msra.mxu0 %v1069
        %1071 = vmatprep.subr.mxu0 0.0
        %v1072 = vand.u32 %v235, 4294901760
        %1073 = vmatpush1.msra.mxu0 %v1072
        %1074 = vmatprep.subr.mxu0 0.0
        %v1075 = vand.u32 %v236, 4294901760
        %1076 = vmatpush1.msra.mxu0 %v1075
        %1077 = vmatprep.subr.mxu0 0.0
        %v1078 = vand.u32 %v237, 4294901760
        %1079 = vmatpush1.msra.mxu0 %v1078
        %1080 = vmatprep.subr.mxu0 0.0
        %v1081 = vand.u32 %v238, 4294901760
        %1082 = vmatpush1.msra.mxu0 %v1081
        %1083 = vmatprep.subr.mxu0 0.0
        %v1084 = vand.u32 %v239, 4294901760
        %1085 = vmatpush1.msra.mxu0 %v1084
        %1086 = vmatprep.subr.mxu0 0.0
        %v1087 = vand.u32 %v240, 4294901760
        %1088 = vmatpush1.msra.mxu0 %v1087
        %1089 = vmatprep.subr.mxu0 0.0
        %v1090 = vand.u32 %v241, 4294901760
        %1091 = vmatpush1.msra.mxu0 %v1090
        %1092 = vmatprep.subr.mxu0 0.0
        %v1093 = vand.u32 %v242, 4294901760
        %1094 = vmatpush1.msra.mxu0 %v1093
        %1095 = vmatprep.subr.mxu0 0.0
        %v1096 = vand.u32 %v243, 4294901760
        %1097 = vmatpush1.msra.mxu0 %v1096
        %1098 = vmatprep.subr.mxu0 0.0
        %v1099 = vand.u32 %v244, 4294901760
        %1100 = vmatpush1.msra.mxu0 %v1099
        %1101 = vmatprep.subr.mxu0 0.0
        %v1102 = vand.u32 %v245, 4294901760
        %1103 = vmatpush1.msra.mxu0 %v1102
        %1104 = vmatprep.subr.mxu0 0.0
        %v1105 = vand.u32 %v246, 4294901760
        %1106 = vmatpush1.msra.mxu0 %v1105
        %1107 = vmatprep.subr.mxu0 0.0
        %v1108 = vand.u32 %v247, 4294901760
        %1109 = vmatpush1.msra.mxu0 %v1108
        %1110 = vmatprep.subr.mxu0 0.0
        %v1111 = vand.u32 %v248, 4294901760
        %1112 = vmatpush1.msra.mxu0 %v1111
        %1113 = vmatprep.subr.mxu0 0.0
        %v1114 = vand.u32 %v249, 4294901760
        %1115 = vmatpush1.msra.mxu0 %v1114
        %1116 = vmatprep.subr.mxu0 0.0
        %v1117 = vand.u32 %v250, 4294901760
        %1118 = vmatpush1.msra.mxu0 %v1117
        %1119 = vmatprep.subr.mxu0 0.0
        %v1120 = vand.u32 %v251, 4294901760
        %1121 = vmatpush1.msra.mxu0 %v1120
        %1122 = vmatprep.subr.mxu0 0.0
        %v1123 = vand.u32 %v252, 4294901760
        %1124 = vmatpush1.msra.mxu0 %v1123
        %1125 = vmatprep.subr.mxu0 0.0
        %v1126 = vand.u32 %v253, 4294901760
        %1127 = vmatpush1.msra.mxu0 %v1126
        %1128 = vmatprep.subr.mxu0 0.0
        %v1129 = vand.u32 %v254, 4294901760
        %1130 = vmatpush1.msra.mxu0 %v1129
        %1131 = vmatprep.subr.mxu0 0.0
        %v1132 = vand.u32 %v255, 4294901760
        %1133 = vmatpush1.msra.mxu0 %v1132
        %1134 = vmatprep.subr.mxu0 0.0
        %v1135 = vand.u32 %v256, 4294901760
        %1136 = vmatpush1.msra.mxu0 %v1135
        %1137 = vmatprep.subr.mxu0 0.0
        %v1138 = vand.u32 %v257, 4294901760
        %1139 = vmatpush1.msra.mxu0 %v1138
        %1140 = vmatprep.subr.mxu0 0.0
        %v1141 = vand.u32 %v258, 4294901760
        %1142 = vmatpush1.msra.mxu0 %v1141
        %1143 = vmatprep.subr.mxu0 0.0
        %v1144 = vand.u32 %v259, 4294901760
        %1145 = vmatpush1.msra.mxu0 %v1144
        %v1146 = vand.u32 %v225, 4294901760
        %1147 = vmatprep.mubr.f32.mxu0 %v1146
        %v1148 = vand.u32 %v224, 4294901760
        %1149 = vmatmul.mubr.f32.gmra.mrb[0].mxu0 %v1148
        %v1150 = vpop.f32.mrb[0].mxu0
        %v1151 = vadd.f32 %v1047, %v1150
        %v1152 = vpop.f32.mrb[0].mxu0
        %1153 = vdwg.mxu0
        %1154 = vmatprep.subr.mxu0 0.0
        %v1155 = vand.u32 %v260, 4294901760
        %1156 = vmatpush1.msra.mxu0 %v1155
        %1157 = vmatprep.subr.mxu0 0.0
        %v1158 = vand.u32 %v261, 4294901760
        %1159 = vmatpush1.msra.mxu0 %v1158
        %1160 = vmatprep.subr.mxu0 0.0
        %v1161 = vand.u32 %v262, 4294901760
        %1162 = vmatpush1.msra.mxu0 %v1161
        %1163 = vmatprep.subr.mxu0 0.0
        %v1164 = vand.u32 %v263, 4294901760
        %1165 = vmatpush1.msra.mxu0 %v1164
        %1166 = vmatprep.subr.mxu0 0.0
        %v1167 = vand.u32 %v264, 4294901760
        %1168 = vmatpush1.msra.mxu0 %v1167
        %1169 = vmatprep.subr.mxu0 0.0
        %v1170 = vand.u32 %v265, 4294901760
        %1171 = vmatpush1.msra.mxu0 %v1170
        %1172 = vmatprep.subr.mxu0 0.0
        %v1173 = vand.u32 %v266, 4294901760
        %1174 = vmatpush1.msra.mxu0 %v1173
        %1175 = vmatprep.subr.mxu0 0.0
        %v1176 = vand.u32 %v267, 4294901760
        %1177 = vmatpush1.msra.mxu0 %v1176
        %1178 = vmatprep.subr.mxu0 0.0
        %v1179 = vand.u32 %v268, 4294901760
        %1180 = vmatpush1.msra.mxu0 %v1179
        %1181 = vmatprep.subr.mxu0 0.0
        %v1182 = vand.u32 %v269, 4294901760
        %1183 = vmatpush1.msra.mxu0 %v1182
        %1184 = vmatprep.subr.mxu0 0.0
        %v1185 = vand.u32 %v270, 4294901760
        %1186 = vmatpush1.msra.mxu0 %v1185
        %1187 = vmatprep.subr.mxu0 0.0
        %v1188 = vand.u32 %v271, 4294901760
        %1189 = vmatpush1.msra.mxu0 %v1188
        %1190 = vmatprep.subr.mxu0 0.0
        %v1191 = vand.u32 %v272, 4294901760
        %1192 = vmatpush1.msra.mxu0 %v1191
        %1193 = vmatprep.subr.mxu0 0.0
        %v1194 = vand.u32 %v273, 4294901760
        %1195 = vmatpush1.msra.mxu0 %v1194
        %1196 = vmatprep.subr.mxu0 0.0
        %v1197 = vand.u32 %v274, 4294901760
        %1198 = vmatpush1.msra.mxu0 %v1197
        %1199 = vmatprep.subr.mxu0 0.0
        %v1200 = vand.u32 %v275, 4294901760
        %1201 = vmatpush1.msra.mxu0 %v1200
        %1202 = vmatprep.subr.mxu0 0.0
        %v1203 = vand.u32 %v276, 4294901760
        %1204 = vmatpush1.msra.mxu0 %v1203
        %1205 = vmatprep.subr.mxu0 0.0
        %v1206 = vand.u32 %v277, 4294901760
        %1207 = vmatpush1.msra.mxu0 %v1206
        %1208 = vmatprep.subr.mxu0 0.0
        %v1209 = vand.u32 %v278, 4294901760
        %1210 = vmatpush1.msra.mxu0 %v1209
        %1211 = vmatprep.subr.mxu0 0.0
        %v1212 = vand.u32 %v279, 4294901760
        %1213 = vmatpush1.msra.mxu0 %v1212
        %1214 = vmatprep.subr.mxu0 0.0
        %v1215 = vand.u32 %v280, 4294901760
        %1216 = vmatpush1.msra.mxu0 %v1215
        %1217 = vmatprep.subr.mxu0 0.0
        %v1218 = vand.u32 %v281, 4294901760
        %1219 = vmatpush1.msra.mxu0 %v1218
        %1220 = vmatprep.subr.mxu0 0.0
        %v1221 = vand.u32 %v282, 4294901760
        %1222 = vmatpush1.msra.mxu0 %v1221
        %1223 = vmatprep.subr.mxu0 0.0
        %v1224 = vand.u32 %v283, 4294901760
        %1225 = vmatpush1.msra.mxu0 %v1224
        %1226 = vmatprep.subr.mxu0 0.0
        %v1227 = vand.u32 %v284, 4294901760
        %1228 = vmatpush1.msra.mxu0 %v1227
        %1229 = vmatprep.subr.mxu0 0.0
        %v1230 = vand.u32 %v285, 4294901760
        %1231 = vmatpush1.msra.mxu0 %v1230
        %1232 = vmatprep.subr.mxu0 0.0
        %v1233 = vand.u32 %v286, 4294901760
        %1234 = vmatpush1.msra.mxu0 %v1233
        %1235 = vmatprep.subr.mxu0 0.0
        %v1236 = vand.u32 %v287, 4294901760
        %1237 = vmatpush1.msra.mxu0 %v1236
        %1238 = vmatprep.subr.mxu0 0.0
        %v1239 = vand.u32 %v288, 4294901760
        %1240 = vmatpush1.msra.mxu0 %v1239
        %1241 = vmatprep.subr.mxu0 0.0
        %v1242 = vand.u32 %v289, 4294901760
        %1243 = vmatpush1.msra.mxu0 %v1242
        %1244 = vmatprep.subr.mxu0 0.0
        %v1245 = vand.u32 %v290, 4294901760
        %1246 = vmatpush1.msra.mxu0 %v1245
        %1247 = vmatprep.subr.mxu0 0.0
        %v1248 = vand.u32 %v291, 4294901760
        %1249 = vmatpush1.msra.mxu0 %v1248
        %v1250 = vand.u32 %v227, 4294901760
        %v1251 = vsub.f32 %v227, %v1250
        %v1252 = vand.u32 %v1251, 4294901760
        %v1253 = vsub.f32 %v1251, %v1252
        %v1254 = vand.u32 %v1253, 4294901760
        %1255 = vmatprep.mubr.f32.mxu0 %v1254
        %v1256 = vand.u32 %v226, 4294901760
        %v1257 = vsub.f32 %v226, %v1256
        %v1258 = vand.u32 %v1257, 4294901760
        %v1259 = vsub.f32 %v1257, %v1258
        %v1260 = vand.u32 %v1259, 4294901760
        %1261 = vmatmul.mubr.f32.gmra.mrb[0].mxu0 %v1260
        %v1262 = vpop.f32.mrb[0].mxu0
        %v1263 = vadd.f32 %v1151, %v1262
        %v1264 = vpop.f32.mrb[0].mxu0
        %1265 = vdwg.mxu0
        %1266 = vmatprep.subr.mxu0 0.0
        %v1267 = vand.u32 %v260, 4294901760
        %v1268 = vsub.f32 %v260, %v1267
        %v1269 = vand.u32 %v1268, 4294901760
        %v1270 = vsub.f32 %v1268, %v1269
        %v1271 = vand.u32 %v1270, 4294901760
        %1272 = vmatpush1.msra.mxu0 %v1271
        %1273 = vmatprep.subr.mxu0 0.0
        %v1274 = vand.u32 %v261, 4294901760
        %v1275 = vsub.f32 %v261, %v1274
        %v1276 = vand.u32 %v1275, 4294901760
        %v1277 = vsub.f32 %v1275, %v1276
        %v1278 = vand.u32 %v1277, 4294901760
        %1279 = vmatpush1.msra.mxu0 %v1278
        %1280 = vmatprep.subr.mxu0 0.0
        %v1281 = vand.u32 %v262, 4294901760
        %v1282 = vsub.f32 %v262, %v1281
        %v1283 = vand.u32 %v1282, 4294901760
        %v1284 = vsub.f32 %v1282, %v1283
        %v1285 = vand.u32 %v1284, 4294901760
        %1286 = vmatpush1.msra.mxu0 %v1285
        %1287 = vmatprep.subr.mxu0 0.0
        %v1288 = vand.u32 %v263, 4294901760
        %v1289 = vsub.f32 %v263, %v1288
        %v1290 = vand.u32 %v1289, 4294901760
        %v1291 = vsub.f32 %v1289, %v1290
        %v1292 = vand.u32 %v1291, 4294901760
        %1293 = vmatpush1.msra.mxu0 %v1292
        %1294 = vmatprep.subr.mxu0 0.0
        %v1295 = vand.u32 %v264, 4294901760
        %v1296 = vsub.f32 %v264, %v1295
        %v1297 = vand.u32 %v1296, 4294901760
        %v1298 = vsub.f32 %v1296, %v1297
        %v1299 = vand.u32 %v1298, 4294901760
        %1300 = vmatpush1.msra.mxu0 %v1299
        %1301 = vmatprep.subr.mxu0 0.0
        %v1302 = vand.u32 %v265, 4294901760
        %v1303 = vsub.f32 %v265, %v1302
        %v1304 = vand.u32 %v1303, 4294901760
        %v1305 = vsub.f32 %v1303, %v1304
        %v1306 = vand.u32 %v1305, 4294901760
        %1307 = vmatpush1.msra.mxu0 %v1306
        %1308 = vmatprep.subr.mxu0 0.0
        %v1309 = vand.u32 %v266, 4294901760
        %v1310 = vsub.f32 %v266, %v1309
        %v1311 = vand.u32 %v1310, 4294901760
        %v1312 = vsub.f32 %v1310, %v1311
        %v1313 = vand.u32 %v1312, 4294901760
        %1314 = vmatpush1.msra.mxu0 %v1313
        %1315 = vmatprep.subr.mxu0 0.0
        %v1316 = vand.u32 %v267, 4294901760
        %v1317 = vsub.f32 %v267, %v1316
        %v1318 = vand.u32 %v1317, 4294901760
        %v1319 = vsub.f32 %v1317, %v1318
        %v1320 = vand.u32 %v1319, 4294901760
        %1321 = vmatpush1.msra.mxu0 %v1320
        %1322 = vmatprep.subr.mxu0 0.0
        %v1323 = vand.u32 %v268, 4294901760
        %v1324 = vsub.f32 %v268, %v1323
        %v1325 = vand.u32 %v1324, 4294901760
        %v1326 = vsub.f32 %v1324, %v1325
        %v1327 = vand.u32 %v1326, 4294901760
        %1328 = vmatpush1.msra.mxu0 %v1327
        %1329 = vmatprep.subr.mxu0 0.0
        %v1330 = vand.u32 %v269, 4294901760
        %v1331 = vsub.f32 %v269, %v1330
        %v1332 = vand.u32 %v1331, 4294901760
        %v1333 = vsub.f32 %v1331, %v1332
        %v1334 = vand.u32 %v1333, 4294901760
        %1335 = vmatpush1.msra.mxu0 %v1334
        %1336 = vmatprep.subr.mxu0 0.0
        %v1337 = vand.u32 %v270, 4294901760
        %v1338 = vsub.f32 %v270, %v1337
        %v1339 = vand.u32 %v1338, 4294901760
        %v1340 = vsub.f32 %v1338, %v1339
        %v1341 = vand.u32 %v1340, 4294901760
        %1342 = vmatpush1.msra.mxu0 %v1341
        %1343 = vmatprep.subr.mxu0 0.0
        %v1344 = vand.u32 %v271, 4294901760
        %v1345 = vsub.f32 %v271, %v1344
        %v1346 = vand.u32 %v1345, 4294901760
        %v1347 = vsub.f32 %v1345, %v1346
        %v1348 = vand.u32 %v1347, 4294901760
        %1349 = vmatpush1.msra.mxu0 %v1348
        %1350 = vmatprep.subr.mxu0 0.0
        %v1351 = vand.u32 %v272, 4294901760
        %v1352 = vsub.f32 %v272, %v1351
        %v1353 = vand.u32 %v1352, 4294901760
        %v1354 = vsub.f32 %v1352, %v1353
        %v1355 = vand.u32 %v1354, 4294901760
        %1356 = vmatpush1.msra.mxu0 %v1355
        %1357 = vmatprep.subr.mxu0 0.0
        %v1358 = vand.u32 %v273, 4294901760
        %v1359 = vsub.f32 %v273, %v1358
        %v1360 = vand.u32 %v1359, 4294901760
        %v1361 = vsub.f32 %v1359, %v1360
        %v1362 = vand.u32 %v1361, 4294901760
        %1363 = vmatpush1.msra.mxu0 %v1362
        %1364 = vmatprep.subr.mxu0 0.0
        %v1365 = vand.u32 %v274, 4294901760
        %v1366 = vsub.f32 %v274, %v1365
        %v1367 = vand.u32 %v1366, 4294901760
        %v1368 = vsub.f32 %v1366, %v1367
        %v1369 = vand.u32 %v1368, 4294901760
        %1370 = vmatpush1.msra.mxu0 %v1369
        %1371 = vmatprep.subr.mxu0 0.0
        %v1372 = vand.u32 %v275, 4294901760
        %v1373 = vsub.f32 %v275, %v1372
        %v1374 = vand.u32 %v1373, 4294901760
        %v1375 = vsub.f32 %v1373, %v1374
        %v1376 = vand.u32 %v1375, 4294901760
        %1377 = vmatpush1.msra.mxu0 %v1376
        %1378 = vmatprep.subr.mxu0 0.0
        %v1379 = vand.u32 %v276, 4294901760
        %v1380 = vsub.f32 %v276, %v1379
        %v1381 = vand.u32 %v1380, 4294901760
        %v1382 = vsub.f32 %v1380, %v1381
        %v1383 = vand.u32 %v1382, 4294901760
        %1384 = vmatpush1.msra.mxu0 %v1383
        %1385 = vmatprep.subr.mxu0 0.0
        %v1386 = vand.u32 %v277, 4294901760
        %v1387 = vsub.f32 %v277, %v1386
        %v1388 = vand.u32 %v1387, 4294901760
        %v1389 = vsub.f32 %v1387, %v1388
        %v1390 = vand.u32 %v1389, 4294901760
        %1391 = vmatpush1.msra.mxu0 %v1390
        %1392 = vmatprep.subr.mxu0 0.0
        %v1393 = vand.u32 %v278, 4294901760
        %v1394 = vsub.f32 %v278, %v1393
        %v1395 = vand.u32 %v1394, 4294901760
        %v1396 = vsub.f32 %v1394, %v1395
        %v1397 = vand.u32 %v1396, 4294901760
        %1398 = vmatpush1.msra.mxu0 %v1397
        %1399 = vmatprep.subr.mxu0 0.0
        %v1400 = vand.u32 %v279, 4294901760
        %v1401 = vsub.f32 %v279, %v1400
        %v1402 = vand.u32 %v1401, 4294901760
        %v1403 = vsub.f32 %v1401, %v1402
        %v1404 = vand.u32 %v1403, 4294901760
        %1405 = vmatpush1.msra.mxu0 %v1404
        %1406 = vmatprep.subr.mxu0 0.0
        %v1407 = vand.u32 %v280, 4294901760
        %v1408 = vsub.f32 %v280, %v1407
        %v1409 = vand.u32 %v1408, 4294901760
        %v1410 = vsub.f32 %v1408, %v1409
        %v1411 = vand.u32 %v1410, 4294901760
        %1412 = vmatpush1.msra.mxu0 %v1411
        %1413 = vmatprep.subr.mxu0 0.0
        %v1414 = vand.u32 %v281, 4294901760
        %v1415 = vsub.f32 %v281, %v1414
        %v1416 = vand.u32 %v1415, 4294901760
        %v1417 = vsub.f32 %v1415, %v1416
        %v1418 = vand.u32 %v1417, 4294901760
        %1419 = vmatpush1.msra.mxu0 %v1418
        %1420 = vmatprep.subr.mxu0 0.0
        %v1421 = vand.u32 %v282, 4294901760
        %v1422 = vsub.f32 %v282, %v1421
        %v1423 = vand.u32 %v1422, 4294901760
        %v1424 = vsub.f32 %v1422, %v1423
        %v1425 = vand.u32 %v1424, 4294901760
        %1426 = vmatpush1.msra.mxu0 %v1425
        %1427 = vmatprep.subr.mxu0 0.0
        %v1428 = vand.u32 %v283, 4294901760
        %v1429 = vsub.f32 %v283, %v1428
        %v1430 = vand.u32 %v1429, 4294901760
        %v1431 = vsub.f32 %v1429, %v1430
        %v1432 = vand.u32 %v1431, 4294901760
        %1433 = vmatpush1.msra.mxu0 %v1432
        %1434 = vmatprep.subr.mxu0 0.0
        %v1435 = vand.u32 %v284, 4294901760
        %v1436 = vsub.f32 %v284, %v1435
        %v1437 = vand.u32 %v1436, 4294901760
        %v1438 = vsub.f32 %v1436, %v1437
        %v1439 = vand.u32 %v1438, 4294901760
        %1440 = vmatpush1.msra.mxu0 %v1439
        %1441 = vmatprep.subr.mxu0 0.0
        %v1442 = vand.u32 %v285, 4294901760
        %v1443 = vsub.f32 %v285, %v1442
        %v1444 = vand.u32 %v1443, 4294901760
        %v1445 = vsub.f32 %v1443, %v1444
        %v1446 = vand.u32 %v1445, 4294901760
        %1447 = vmatpush1.msra.mxu0 %v1446
        %1448 = vmatprep.subr.mxu0 0.0
        %v1449 = vand.u32 %v286, 4294901760
        %v1450 = vsub.f32 %v286, %v1449
        %v1451 = vand.u32 %v1450, 4294901760
        %v1452 = vsub.f32 %v1450, %v1451
        %v1453 = vand.u32 %v1452, 4294901760
        %1454 = vmatpush1.msra.mxu0 %v1453
        %1455 = vmatprep.subr.mxu0 0.0
        %v1456 = vand.u32 %v287, 4294901760
        %v1457 = vsub.f32 %v287, %v1456
        %v1458 = vand.u32 %v1457, 4294901760
        %v1459 = vsub.f32 %v1457, %v1458
        %v1460 = vand.u32 %v1459, 4294901760
        %1461 = vmatpush1.msra.mxu0 %v1460
        %1462 = vmatprep.subr.mxu0 0.0
        %v1463 = vand.u32 %v288, 4294901760
        %v1464 = vsub.f32 %v288, %v1463
        %v1465 = vand.u32 %v1464, 4294901760
        %v1466 = vsub.f32 %v1464, %v1465
        %v1467 = vand.u32 %v1466, 4294901760
        %1468 = vmatpush1.msra.mxu0 %v1467
        %1469 = vmatprep.subr.mxu0 0.0
        %v1470 = vand.u32 %v289, 4294901760
        %v1471 = vsub.f32 %v289, %v1470
        %v1472 = vand.u32 %v1471, 4294901760
        %v1473 = vsub.f32 %v1471, %v1472
        %v1474 = vand.u32 %v1473, 4294901760
        %1475 = vmatpush1.msra.mxu0 %v1474
        %1476 = vmatprep.subr.mxu0 0.0
        %v1477 = vand.u32 %v290, 4294901760
        %v1478 = vsub.f32 %v290, %v1477
        %v1479 = vand.u32 %v1478, 4294901760
        %v1480 = vsub.f32 %v1478, %v1479
        %v1481 = vand.u32 %v1480, 4294901760
        %1482 = vmatpush1.msra.mxu0 %v1481
        %1483 = vmatprep.subr.mxu0 0.0
        %v1484 = vand.u32 %v291, 4294901760
        %v1485 = vsub.f32 %v291, %v1484
        %v1486 = vand.u32 %v1485, 4294901760
        %v1487 = vsub.f32 %v1485, %v1486
        %v1488 = vand.u32 %v1487, 4294901760
        %1489 = vmatpush1.msra.mxu0 %v1488
        %v1490 = vand.u32 %v227, 4294901760
        %1491 = vmatprep.mubr.f32.mxu0 %v1490
        %v1492 = vand.u32 %v226, 4294901760
        %1493 = vmatmul.mubr.f32.gmra.mrb[0].mxu0 %v1492
        %v1494 = vpop.f32.mrb[0].mxu0
        %v1495 = vadd.f32 %v1263, %v1494
        %v1496 = vpop.f32.mrb[0].mxu0
        %1497 = vdwg.mxu0
        %1498 = vmatprep.subr.mxu0 0.0
        %v1499 = vand.u32 %v260, 4294901760
        %v1500 = vsub.f32 %v260, %v1499
        %1501 = vmatpush1.msra.mxu0 %v1500
        %1502 = vmatprep.subr.mxu0 0.0
        %v1503 = vand.u32 %v261, 4294901760
        %v1504 = vsub.f32 %v261, %v1503
        %1505 = vmatpush1.msra.mxu0 %v1504
        %1506 = vmatprep.subr.mxu0 0.0
        %v1507 = vand.u32 %v262, 4294901760
        %v1508 = vsub.f32 %v262, %v1507
        %1509 = vmatpush1.msra.mxu0 %v1508
        %1510 = vmatprep.subr.mxu0 0.0
        %v1511 = vand.u32 %v263, 4294901760
        %v1512 = vsub.f32 %v263, %v1511
        %1513 = vmatpush1.msra.mxu0 %v1512
        %1514 = vmatprep.subr.mxu0 0.0
        %v1515 = vand.u32 %v264, 4294901760
        %v1516 = vsub.f32 %v264, %v1515
        %1517 = vmatpush1.msra.mxu0 %v1516
        %1518 = vmatprep.subr.mxu0 0.0
        %v1519 = vand.u32 %v265, 4294901760
        %v1520 = vsub.f32 %v265, %v1519
        %1521 = vmatpush1.msra.mxu0 %v1520
        %1522 = vmatprep.subr.mxu0 0.0
        %v1523 = vand.u32 %v266, 4294901760
        %v1524 = vsub.f32 %v266, %v1523
        %1525 = vmatpush1.msra.mxu0 %v1524
        %1526 = vmatprep.subr.mxu0 0.0
        %v1527 = vand.u32 %v267, 4294901760
        %v1528 = vsub.f32 %v267, %v1527
        %1529 = vmatpush1.msra.mxu0 %v1528
        %1530 = vmatprep.subr.mxu0 0.0
        %v1531 = vand.u32 %v268, 4294901760
        %v1532 = vsub.f32 %v268, %v1531
        %1533 = vmatpush1.msra.mxu0 %v1532
        %1534 = vmatprep.subr.mxu0 0.0
        %v1535 = vand.u32 %v269, 4294901760
        %v1536 = vsub.f32 %v269, %v1535
        %1537 = vmatpush1.msra.mxu0 %v1536
        %1538 = vmatprep.subr.mxu0 0.0
        %v1539 = vand.u32 %v270, 4294901760
        %v1540 = vsub.f32 %v270, %v1539
        %1541 = vmatpush1.msra.mxu0 %v1540
        %1542 = vmatprep.subr.mxu0 0.0
        %v1543 = vand.u32 %v271, 4294901760
        %v1544 = vsub.f32 %v271, %v1543
        %1545 = vmatpush1.msra.mxu0 %v1544
        %1546 = vmatprep.subr.mxu0 0.0
        %v1547 = vand.u32 %v272, 4294901760
        %v1548 = vsub.f32 %v272, %v1547
        %1549 = vmatpush1.msra.mxu0 %v1548
        %1550 = vmatprep.subr.mxu0 0.0
        %v1551 = vand.u32 %v273, 4294901760
        %v1552 = vsub.f32 %v273, %v1551
        %1553 = vmatpush1.msra.mxu0 %v1552
        %1554 = vmatprep.subr.mxu0 0.0
        %v1555 = vand.u32 %v274, 4294901760
        %v1556 = vsub.f32 %v274, %v1555
        %1557 = vmatpush1.msra.mxu0 %v1556
        %1558 = vmatprep.subr.mxu0 0.0
        %v1559 = vand.u32 %v275, 4294901760
        %v1560 = vsub.f32 %v275, %v1559
        %1561 = vmatpush1.msra.mxu0 %v1560
        %1562 = vmatprep.subr.mxu0 0.0
        %v1563 = vand.u32 %v276, 4294901760
        %v1564 = vsub.f32 %v276, %v1563
        %1565 = vmatpush1.msra.mxu0 %v1564
        %1566 = vmatprep.subr.mxu0 0.0
        %v1567 = vand.u32 %v277, 4294901760
        %v1568 = vsub.f32 %v277, %v1567
        %1569 = vmatpush1.msra.mxu0 %v1568
        %1570 = vmatprep.subr.mxu0 0.0
        %v1571 = vand.u32 %v278, 4294901760
        %v1572 = vsub.f32 %v278, %v1571
        %1573 = vmatpush1.msra.mxu0 %v1572
        %1574 = vmatprep.subr.mxu0 0.0
        %v1575 = vand.u32 %v279, 4294901760
        %v1576 = vsub.f32 %v279, %v1575
        %1577 = vmatpush1.msra.mxu0 %v1576
        %1578 = vmatprep.subr.mxu0 0.0
        %v1579 = vand.u32 %v280, 4294901760
        %v1580 = vsub.f32 %v280, %v1579
        %1581 = vmatpush1.msra.mxu0 %v1580
        %1582 = vmatprep.subr.mxu0 0.0
        %v1583 = vand.u32 %v281, 4294901760
        %v1584 = vsub.f32 %v281, %v1583
        %1585 = vmatpush1.msra.mxu0 %v1584
        %1586 = vmatprep.subr.mxu0 0.0
        %v1587 = vand.u32 %v282, 4294901760
        %v1588 = vsub.f32 %v282, %v1587
        %1589 = vmatpush1.msra.mxu0 %v1588
        %1590 = vmatprep.subr.mxu0 0.0
        %v1591 = vand.u32 %v283, 4294901760
        %v1592 = vsub.f32 %v283, %v1591
        %1593 = vmatpush1.msra.mxu0 %v1592
        %1594 = vmatprep.subr.mxu0 0.0
        %v1595 = vand.u32 %v284, 4294901760
        %v1596 = vsub.f32 %v284, %v1595
        %1597 = vmatpush1.msra.mxu0 %v1596
        %1598 = vmatprep.subr.mxu0 0.0
        %v1599 = vand.u32 %v285, 4294901760
        %v1600 = vsub.f32 %v285, %v1599
        %1601 = vmatpush1.msra.mxu0 %v1600
        %1602 = vmatprep.subr.mxu0 0.0
        %v1603 = vand.u32 %v286, 4294901760
        %v1604 = vsub.f32 %v286, %v1603
        %1605 = vmatpush1.msra.mxu0 %v1604
        %1606 = vmatprep.subr.mxu0 0.0
        %v1607 = vand.u32 %v287, 4294901760
        %v1608 = vsub.f32 %v287, %v1607
        %1609 = vmatpush1.msra.mxu0 %v1608
        %1610 = vmatprep.subr.mxu0 0.0
        %v1611 = vand.u32 %v288, 4294901760
        %v1612 = vsub.f32 %v288, %v1611
        %1613 = vmatpush1.msra.mxu0 %v1612
        %1614 = vmatprep.subr.mxu0 0.0
        %v1615 = vand.u32 %v289, 4294901760
        %v1616 = vsub.f32 %v289, %v1615
        %1617 = vmatpush1.msra.mxu0 %v1616
        %1618 = vmatprep.subr.mxu0 0.0
        %v1619 = vand.u32 %v290, 4294901760
        %v1620 = vsub.f32 %v290, %v1619
        %1621 = vmatpush1.msra.mxu0 %v1620
        %1622 = vmatprep.subr.mxu0 0.0
        %v1623 = vand.u32 %v291, 4294901760
        %v1624 = vsub.f32 %v291, %v1623
        %1625 = vmatpush1.msra.mxu0 %v1624
        %v1626 = vand.u32 %v227, 4294901760
        %v1627 = vsub.f32 %v227, %v1626
        %1628 = vmatprep.mubr.f32.mxu0 %v1627
        %v1629 = vand.u32 %v226, 4294901760
        %v1630 = vsub.f32 %v226, %v1629
        %1631 = vmatmul.mubr.f32.gmra.mrb[0].mxu0 %v1630
        %v1632 = vpop.f32.mrb[0].mxu0
        %v1633 = vadd.f32 %v1495, %v1632
        %v1634 = vpop.f32.mrb[0].mxu0
        %1635 = vdwg.mxu0
        %1636 = vmatprep.subr.mxu0 0.0
        %v1637 = vand.u32 %v260, 4294901760
        %1638 = vmatpush1.msra.mxu0 %v1637
        %1639 = vmatprep.subr.mxu0 0.0
        %v1640 = vand.u32 %v261, 4294901760
        %1641 = vmatpush1.msra.mxu0 %v1640
        %1642 = vmatprep.subr.mxu0 0.0
        %v1643 = vand.u32 %v262, 4294901760
        %1644 = vmatpush1.msra.mxu0 %v1643
        %1645 = vmatprep.subr.mxu0 0.0
        %v1646 = vand.u32 %v263, 4294901760
        %1647 = vmatpush1.msra.mxu0 %v1646
        %1648 = vmatprep.subr.mxu0 0.0
        %v1649 = vand.u32 %v264, 4294901760
        %1650 = vmatpush1.msra.mxu0 %v1649
        %1651 = vmatprep.subr.mxu0 0.0
        %v1652 = vand.u32 %v265, 4294901760
        %1653 = vmatpush1.msra.mxu0 %v1652
        %1654 = vmatprep.subr.mxu0 0.0
        %v1655 = vand.u32 %v266, 4294901760
        %1656 = vmatpush1.msra.mxu0 %v1655
        %1657 = vmatprep.subr.mxu0 0.0
        %v1658 = vand.u32 %v267, 4294901760
        %1659 = vmatpush1.msra.mxu0 %v1658
        %1660 = vmatprep.subr.mxu0 0.0
        %v1661 = vand.u32 %v268, 4294901760
        %1662 = vmatpush1.msra.mxu0 %v1661
        %1663 = vmatprep.subr.mxu0 0.0
        %v1664 = vand.u32 %v269, 4294901760
        %1665 = vmatpush1.msra.mxu0 %v1664
        %1666 = vmatprep.subr.mxu0 0.0
        %v1667 = vand.u32 %v270, 4294901760
        %1668 = vmatpush1.msra.mxu0 %v1667
        %1669 = vmatprep.subr.mxu0 0.0
        %v1670 = vand.u32 %v271, 4294901760
        %1671 = vmatpush1.msra.mxu0 %v1670
        %1672 = vmatprep.subr.mxu0 0.0
        %v1673 = vand.u32 %v272, 4294901760
        %1674 = vmatpush1.msra.mxu0 %v1673
        %1675 = vmatprep.subr.mxu0 0.0
        %v1676 = vand.u32 %v273, 4294901760
        %1677 = vmatpush1.msra.mxu0 %v1676
        %1678 = vmatprep.subr.mxu0 0.0
        %v1679 = vand.u32 %v274, 4294901760
        %1680 = vmatpush1.msra.mxu0 %v1679
        %1681 = vmatprep.subr.mxu0 0.0
        %v1682 = vand.u32 %v275, 4294901760
        %1683 = vmatpush1.msra.mxu0 %v1682
        %1684 = vmatprep.subr.mxu0 0.0
        %v1685 = vand.u32 %v276, 4294901760
        %1686 = vmatpush1.msra.mxu0 %v1685
        %1687 = vmatprep.subr.mxu0 0.0
        %v1688 = vand.u32 %v277, 4294901760
        %1689 = vmatpush1.msra.mxu0 %v1688
        %1690 = vmatprep.subr.mxu0 0.0
        %v1691 = vand.u32 %v278, 4294901760
        %1692 = vmatpush1.msra.mxu0 %v1691
        %1693 = vmatprep.subr.mxu0 0.0
        %v1694 = vand.u32 %v279, 4294901760
        %1695 = vmatpush1.msra.mxu0 %v1694
        %1696 = vmatprep.subr.mxu0 0.0
        %v1697 = vand.u32 %v280, 4294901760
        %1698 = vmatpush1.msra.mxu0 %v1697
        %1699 = vmatprep.subr.mxu0 0.0
        %v1700 = vand.u32 %v281, 4294901760
        %1701 = vmatpush1.msra.mxu0 %v1700
        %1702 = vmatprep.subr.mxu0 0.0
        %v1703 = vand.u32 %v282, 4294901760
        %1704 = vmatpush1.msra.mxu0 %v1703
        %1705 = vmatprep.subr.mxu0 0.0
        %v1706 = vand.u32 %v283, 4294901760
        %1707 = vmatpush1.msra.mxu0 %v1706
        %1708 = vmatprep.subr.mxu0 0.0
        %v1709 = vand.u32 %v284, 4294901760
        %1710 = vmatpush1.msra.mxu0 %v1709
        %1711 = vmatprep.subr.mxu0 0.0
        %v1712 = vand.u32 %v285, 4294901760
        %1713 = vmatpush1.msra.mxu0 %v1712
        %1714 = vmatprep.subr.mxu0 0.0
        %v1715 = vand.u32 %v286, 4294901760
        %1716 = vmatpush1.msra.mxu0 %v1715
        %1717 = vmatprep.subr.mxu0 0.0
        %v1718 = vand.u32 %v287, 4294901760
        %1719 = vmatpush1.msra.mxu0 %v1718
        %1720 = vmatprep.subr.mxu0 0.0
        %v1721 = vand.u32 %v288, 4294901760
        %1722 = vmatpush1.msra.mxu0 %v1721
        %1723 = vmatprep.subr.mxu0 0.0
        %v1724 = vand.u32 %v289, 4294901760
        %1725 = vmatpush1.msra.mxu0 %v1724
        %1726 = vmatprep.subr.mxu0 0.0
        %v1727 = vand.u32 %v290, 4294901760
        %1728 = vmatpush1.msra.mxu0 %v1727
        %1729 = vmatprep.subr.mxu0 0.0
        %v1730 = vand.u32 %v291, 4294901760
        %1731 = vmatpush1.msra.mxu0 %v1730
        %v1732 = vand.u32 %v227, 4294901760
        %v1733 = vsub.f32 %v227, %v1732
        %v1734 = vand.u32 %v1733, 4294901760
        %1735 = vmatprep.mubr.f32.mxu0 %v1734
        %v1736 = vand.u32 %v226, 4294901760
        %v1737 = vsub.f32 %v226, %v1736
        %v1738 = vand.u32 %v1737, 4294901760
        %1739 = vmatmul.mubr.f32.gmra.mrb[0].mxu0 %v1738
        %v1740 = vpop.f32.mrb[0].mxu0
        %v1741 = vadd.f32 %v1633, %v1740
        %v1742 = vpop.f32.mrb[0].mxu0
        %1743 = vdwg.mxu0
        %1744 = vmatprep.subr.mxu0 0.0
        %v1745 = vand.u32 %v260, 4294901760
        %v1746 = vsub.f32 %v260, %v1745
        %v1747 = vand.u32 %v1746, 4294901760
        %1748 = vmatpush1.msra.mxu0 %v1747
        %1749 = vmatprep.subr.mxu0 0.0
        %v1750 = vand.u32 %v261, 4294901760
        %v1751 = vsub.f32 %v261, %v1750
        %v1752 = vand.u32 %v1751, 4294901760
        %1753 = vmatpush1.msra.mxu0 %v1752
        %1754 = vmatprep.subr.mxu0 0.0
        %v1755 = vand.u32 %v262, 4294901760
        %v1756 = vsub.f32 %v262, %v1755
        %v1757 = vand.u32 %v1756, 4294901760
        %1758 = vmatpush1.msra.mxu0 %v1757
        %1759 = vmatprep.subr.mxu0 0.0
        %v1760 = vand.u32 %v263, 4294901760
        %v1761 = vsub.f32 %v263, %v1760
        %v1762 = vand.u32 %v1761, 4294901760
        %1763 = vmatpush1.msra.mxu0 %v1762
        %1764 = vmatprep.subr.mxu0 0.0
        %v1765 = vand.u32 %v264, 4294901760
        %v1766 = vsub.f32 %v264, %v1765
        %v1767 = vand.u32 %v1766, 4294901760
        %1768 = vmatpush1.msra.mxu0 %v1767
        %1769 = vmatprep.subr.mxu0 0.0
        %v1770 = vand.u32 %v265, 4294901760
        %v1771 = vsub.f32 %v265, %v1770
        %v1772 = vand.u32 %v1771, 4294901760
        %1773 = vmatpush1.msra.mxu0 %v1772
        %1774 = vmatprep.subr.mxu0 0.0
        %v1775 = vand.u32 %v266, 4294901760
        %v1776 = vsub.f32 %v266, %v1775
        %v1777 = vand.u32 %v1776, 4294901760
        %1778 = vmatpush1.msra.mxu0 %v1777
        %1779 = vmatprep.subr.mxu0 0.0
        %v1780 = vand.u32 %v267, 4294901760
        %v1781 = vsub.f32 %v267, %v1780
        %v1782 = vand.u32 %v1781, 4294901760
        %1783 = vmatpush1.msra.mxu0 %v1782
        %1784 = vmatprep.subr.mxu0 0.0
        %v1785 = vand.u32 %v268, 4294901760
        %v1786 = vsub.f32 %v268, %v1785
        %v1787 = vand.u32 %v1786, 4294901760
        %1788 = vmatpush1.msra.mxu0 %v1787
        %1789 = vmatprep.subr.mxu0 0.0
        %v1790 = vand.u32 %v269, 4294901760
        %v1791 = vsub.f32 %v269, %v1790
        %v1792 = vand.u32 %v1791, 4294901760
        %1793 = vmatpush1.msra.mxu0 %v1792
        %1794 = vmatprep.subr.mxu0 0.0
        %v1795 = vand.u32 %v270, 4294901760
        %v1796 = vsub.f32 %v270, %v1795
        %v1797 = vand.u32 %v1796, 4294901760
        %1798 = vmatpush1.msra.mxu0 %v1797
        %1799 = vmatprep.subr.mxu0 0.0
        %v1800 = vand.u32 %v271, 4294901760
        %v1801 = vsub.f32 %v271, %v1800
        %v1802 = vand.u32 %v1801, 4294901760
        %1803 = vmatpush1.msra.mxu0 %v1802
        %1804 = vmatprep.subr.mxu0 0.0
        %v1805 = vand.u32 %v272, 4294901760
        %v1806 = vsub.f32 %v272, %v1805
        %v1807 = vand.u32 %v1806, 4294901760
        %1808 = vmatpush1.msra.mxu0 %v1807
        %1809 = vmatprep.subr.mxu0 0.0
        %v1810 = vand.u32 %v273, 4294901760
        %v1811 = vsub.f32 %v273, %v1810
        %v1812 = vand.u32 %v1811, 4294901760
        %1813 = vmatpush1.msra.mxu0 %v1812
        %1814 = vmatprep.subr.mxu0 0.0
        %v1815 = vand.u32 %v274, 4294901760
        %v1816 = vsub.f32 %v274, %v1815
        %v1817 = vand.u32 %v1816, 4294901760
        %1818 = vmatpush1.msra.mxu0 %v1817
        %1819 = vmatprep.subr.mxu0 0.0
        %v1820 = vand.u32 %v275, 4294901760
        %v1821 = vsub.f32 %v275, %v1820
        %v1822 = vand.u32 %v1821, 4294901760
        %1823 = vmatpush1.msra.mxu0 %v1822
        %1824 = vmatprep.subr.mxu0 0.0
        %v1825 = vand.u32 %v276, 4294901760
        %v1826 = vsub.f32 %v276, %v1825
        %v1827 = vand.u32 %v1826, 4294901760
        %1828 = vmatpush1.msra.mxu0 %v1827
        %1829 = vmatprep.subr.mxu0 0.0
        %v1830 = vand.u32 %v277, 4294901760
        %v1831 = vsub.f32 %v277, %v1830
        %v1832 = vand.u32 %v1831, 4294901760
        %1833 = vmatpush1.msra.mxu0 %v1832
        %1834 = vmatprep.subr.mxu0 0.0
        %v1835 = vand.u32 %v278, 4294901760
        %v1836 = vsub.f32 %v278, %v1835
        %v1837 = vand.u32 %v1836, 4294901760
        %1838 = vmatpush1.msra.mxu0 %v1837
        %1839 = vmatprep.subr.mxu0 0.0
        %v1840 = vand.u32 %v279, 4294901760
        %v1841 = vsub.f32 %v279, %v1840
        %v1842 = vand.u32 %v1841, 4294901760
        %1843 = vmatpush1.msra.mxu0 %v1842
        %1844 = vmatprep.subr.mxu0 0.0
        %v1845 = vand.u32 %v280, 4294901760
        %v1846 = vsub.f32 %v280, %v1845
        %v1847 = vand.u32 %v1846, 4294901760
        %1848 = vmatpush1.msra.mxu0 %v1847
        %1849 = vmatprep.subr.mxu0 0.0
        %v1850 = vand.u32 %v281, 4294901760
        %v1851 = vsub.f32 %v281, %v1850
        %v1852 = vand.u32 %v1851, 4294901760
        %1853 = vmatpush1.msra.mxu0 %v1852
        %1854 = vmatprep.subr.mxu0 0.0
        %v1855 = vand.u32 %v282, 4294901760
        %v1856 = vsub.f32 %v282, %v1855
        %v1857 = vand.u32 %v1856, 4294901760
        %1858 = vmatpush1.msra.mxu0 %v1857
        %1859 = vmatprep.subr.mxu0 0.0
        %v1860 = vand.u32 %v283, 4294901760
        %v1861 = vsub.f32 %v283, %v1860
        %v1862 = vand.u32 %v1861, 4294901760
        %1863 = vmatpush1.msra.mxu0 %v1862
        %1864 = vmatprep.subr.mxu0 0.0
        %v1865 = vand.u32 %v284, 4294901760
        %v1866 = vsub.f32 %v284, %v1865
        %v1867 = vand.u32 %v1866, 4294901760
        %1868 = vmatpush1.msra.mxu0 %v1867
        %1869 = vmatprep.subr.mxu0 0.0
        %v1870 = vand.u32 %v285, 4294901760
        %v1871 = vsub.f32 %v285, %v1870
        %v1872 = vand.u32 %v1871, 4294901760
        %1873 = vmatpush1.msra.mxu0 %v1872
        %1874 = vmatprep.subr.mxu0 0.0
        %v1875 = vand.u32 %v286, 4294901760
        %v1876 = vsub.f32 %v286, %v1875
        %v1877 = vand.u32 %v1876, 4294901760
        %1878 = vmatpush1.msra.mxu0 %v1877
        %1879 = vmatprep.subr.mxu0 0.0
        %v1880 = vand.u32 %v287, 4294901760
        %v1881 = vsub.f32 %v287, %v1880
        %v1882 = vand.u32 %v1881, 4294901760
        %1883 = vmatpush1.msra.mxu0 %v1882
        %1884 = vmatprep.subr.mxu0 0.0
        %v1885 = vand.u32 %v288, 4294901760
        %v1886 = vsub.f32 %v288, %v1885
        %v1887 = vand.u32 %v1886, 4294901760
        %1888 = vmatpush1.msra.mxu0 %v1887
        %1889 = vmatprep.subr.mxu0 0.0
        %v1890 = vand.u32 %v289, 4294901760
        %v1891 = vsub.f32 %v289, %v1890
        %v1892 = vand.u32 %v1891, 4294901760
        %1893 = vmatpush1.msra.mxu0 %v1892
        %1894 = vmatprep.subr.mxu0 0.0
        %v1895 = vand.u32 %v290, 4294901760
        %v1896 = vsub.f32 %v290, %v1895
        %v1897 = vand.u32 %v1896, 4294901760
        %1898 = vmatpush1.msra.mxu0 %v1897
        %1899 = vmatprep.subr.mxu0 0.0
        %v1900 = vand.u32 %v291, 4294901760
        %v1901 = vsub.f32 %v291, %v1900
        %v1902 = vand.u32 %v1901, 4294901760
        %1903 = vmatpush1.msra.mxu0 %v1902
        %v1904 = vand.u32 %v227, 4294901760
        %1905 = vmatprep.mubr.f32.mxu0 %v1904
        %v1906 = vand.u32 %v226, 4294901760
        %1907 = vmatmul.mubr.f32.gmra.mrb[0].mxu0 %v1906
        %v1908 = vpop.f32.mrb[0].mxu0
        %v1909 = vadd.f32 %v1741, %v1908
        %v1910 = vpop.f32.mrb[0].mxu0
        %1911 = vdwg.mxu0
        %1912 = vmatprep.subr.mxu0 0.0
        %v1913 = vand.u32 %v260, 4294901760
        %1914 = vmatpush1.msra.mxu0 %v1913
        %1915 = vmatprep.subr.mxu0 0.0
        %v1916 = vand.u32 %v261, 4294901760
        %1917 = vmatpush1.msra.mxu0 %v1916
        %1918 = vmatprep.subr.mxu0 0.0
        %v1919 = vand.u32 %v262, 4294901760
        %1920 = vmatpush1.msra.mxu0 %v1919
        %1921 = vmatprep.subr.mxu0 0.0
        %v1922 = vand.u32 %v263, 4294901760
        %1923 = vmatpush1.msra.mxu0 %v1922
        %1924 = vmatprep.subr.mxu0 0.0
        %v1925 = vand.u32 %v264, 4294901760
        %1926 = vmatpush1.msra.mxu0 %v1925
        %1927 = vmatprep.subr.mxu0 0.0
        %v1928 = vand.u32 %v265, 4294901760
        %1929 = vmatpush1.msra.mxu0 %v1928
        %1930 = vmatprep.subr.mxu0 0.0
        %v1931 = vand.u32 %v266, 4294901760
        %1932 = vmatpush1.msra.mxu0 %v1931
        %1933 = vmatprep.subr.mxu0 0.0
        %v1934 = vand.u32 %v267, 4294901760
        %1935 = vmatpush1.msra.mxu0 %v1934
        %1936 = vmatprep.subr.mxu0 0.0
        %v1937 = vand.u32 %v268, 4294901760
        %1938 = vmatpush1.msra.mxu0 %v1937
        %1939 = vmatprep.subr.mxu0 0.0
        %v1940 = vand.u32 %v269, 4294901760
        %1941 = vmatpush1.msra.mxu0 %v1940
        %1942 = vmatprep.subr.mxu0 0.0
        %v1943 = vand.u32 %v270, 4294901760
        %1944 = vmatpush1.msra.mxu0 %v1943
        %1945 = vmatprep.subr.mxu0 0.0
        %v1946 = vand.u32 %v271, 4294901760
        %1947 = vmatpush1.msra.mxu0 %v1946
        %1948 = vmatprep.subr.mxu0 0.0
        %v1949 = vand.u32 %v272, 4294901760
        %1950 = vmatpush1.msra.mxu0 %v1949
        %1951 = vmatprep.subr.mxu0 0.0
        %v1952 = vand.u32 %v273, 4294901760
        %1953 = vmatpush1.msra.mxu0 %v1952
        %1954 = vmatprep.subr.mxu0 0.0
        %v1955 = vand.u32 %v274, 4294901760
        %1956 = vmatpush1.msra.mxu0 %v1955
        %1957 = vmatprep.subr.mxu0 0.0
        %v1958 = vand.u32 %v275, 4294901760
        %1959 = vmatpush1.msra.mxu0 %v1958
        %1960 = vmatprep.subr.mxu0 0.0
        %v1961 = vand.u32 %v276, 4294901760
        %1962 = vmatpush1.msra.mxu0 %v1961
        %1963 = vmatprep.subr.mxu0 0.0
        %v1964 = vand.u32 %v277, 4294901760
        %1965 = vmatpush1.msra.mxu0 %v1964
        %1966 = vmatprep.subr.mxu0 0.0
        %v1967 = vand.u32 %v278, 4294901760
        %1968 = vmatpush1.msra.mxu0 %v1967
        %1969 = vmatprep.subr.mxu0 0.0
        %v1970 = vand.u32 %v279, 4294901760
        %1971 = vmatpush1.msra.mxu0 %v1970
        %1972 = vmatprep.subr.mxu0 0.0
        %v1973 = vand.u32 %v280, 4294901760
        %1974 = vmatpush1.msra.mxu0 %v1973
        %1975 = vmatprep.subr.mxu0 0.0
        %v1976 = vand.u32 %v281, 4294901760
        %1977 = vmatpush1.msra.mxu0 %v1976
        %1978 = vmatprep.subr.mxu0 0.0
        %v1979 = vand.u32 %v282, 4294901760
        %1980 = vmatpush1.msra.mxu0 %v1979
        %1981 = vmatprep.subr.mxu0 0.0
        %v1982 = vand.u32 %v283, 4294901760
        %1983 = vmatpush1.msra.mxu0 %v1982
        %1984 = vmatprep.subr.mxu0 0.0
        %v1985 = vand.u32 %v284, 4294901760
        %1986 = vmatpush1.msra.mxu0 %v1985
        %1987 = vmatprep.subr.mxu0 0.0
        %v1988 = vand.u32 %v285, 4294901760
        %1989 = vmatpush1.msra.mxu0 %v1988
        %1990 = vmatprep.subr.mxu0 0.0
        %v1991 = vand.u32 %v286, 4294901760
        %1992 = vmatpush1.msra.mxu0 %v1991
        %1993 = vmatprep.subr.mxu0 0.0
        %v1994 = vand.u32 %v287, 4294901760
        %1995 = vmatpush1.msra.mxu0 %v1994
        %1996 = vmatprep.subr.mxu0 0.0
        %v1997 = vand.u32 %v288, 4294901760
        %1998 = vmatpush1.msra.mxu0 %v1997
        %1999 = vmatprep.subr.mxu0 0.0
        %v2000 = vand.u32 %v289, 4294901760
        %2001 = vmatpush1.msra.mxu0 %v2000
        %2002 = vmatprep.subr.mxu0 0.0
        %v2003 = vand.u32 %v290, 4294901760
        %2004 = vmatpush1.msra.mxu0 %v2003
        %2005 = vmatprep.subr.mxu0 0.0
        %v2006 = vand.u32 %v291, 4294901760
        %2007 = vmatpush1.msra.mxu0 %v2006
        %v2008 = vand.u32 %v227, 4294901760
        %2009 = vmatprep.mubr.f32.mxu0 %v2008
        %v2010 = vand.u32 %v226, 4294901760
        %2011 = vmatmul.mubr.f32.gmra.mrb[0].mxu0 %v2010
        %v2012 = vpop.f32.mrb[0].mxu0
        %v2013 = vadd.f32 %v1909, %v2012
        %v2014 = vpop.f32.mrb[0].mxu0
        %2015 = vdwg.mxu0
        %v2016 = vld [vmem:[%s184] sm:$0xff]
        %v2017 = vsub.f32 %v2016, %v2013
        %v2018 = vmul.f32 %v2017, %v2017
        %vm2019 = vcmask 785408
        %v2020 = vsel %vm2019, %v2018, 0.0
        %2021 = vadd.xlane.f32.xlu0 %v2020
        %v2022 = vpop.xlane.xlu0 %2021
        %v2023 = vmax.f32 %v2022, 1e-12
        %v2024 = vmin.f32 %v2023, 1e+12
        %s2025 = smul.u32 %s17, 8
        %v2026 = vlaneseq
        %v2027 = vshrl.u32 %v2026, 7
        %v2028 = vstv %s2025
        %v2029 = vadd.s32 %v2028, %v2027
        %vm2030 = vcmp.lt.s32.totalorder %v2029, 16
        %v2031 = vsel %vm2030, %v2024, 0.0
        %v2032 = vrot.slane %v2031, 4
        %v2033 = vadd.f32 %v2031, %v2032
        %v2034 = vrot.slane %v2033, 2
        %v2035 = vadd.f32 %v2033, %v2034
        %v2036 = vrot.slane %v2035, 1
        %v2037 = vadd.f32 %v2035, %v2036
        %2038 = vst [vmem:[%s175] sm:$0x1] %v2037
        %s2039 = sand.u32 %s98, 1
        %s2040 = scalar_lea.sflag [#allocation3], %s2039
        %s2041 = sand.u32 %s98, 1
        %s2042 = scalar_lea.vmem [#allocation2], %s2041
        // Predicated region
        $region33: #{tpu_custom_call.1} parent=31 // pred_check
          %p2043 = pneg %p108
        $region34: #{tpu_custom_call.1} parent=31 // pred_check_branch
          %2045 = sbr.rel (%p2043) target = $region36
        $region35: #{tpu_custom_call.1} parent=31 // pred_region
          %s2047 = ssub.s32 16, 16
          %2048 = vsyncadd %s2040, %s2047
          %s2049 = smul.addr %s17, 16
          %s2050 = scalar_lea.hbm %s3, %s2049
          %s2052 = sshll.u32 %s2042, 4
          %s2053 = int_to_ptr.vmem [resolvable:$true] %s2052
          %2055 = dma.vmem_to_hbm [thread:$0]  %s2053, 16, %s2050, %s2040
        $region36: #{tpu_custom_call.1} parent=31 // pred_fallthru
          _
      $region32: #{tpu_custom_call.1} parent=5 // pred_fallthru
        _
      %p2056 = scmp.le.s32.totalorder 2, %s12
      // Predicated region
      $region37: #{tpu_custom_call.1} parent=5 // pred_check
        %p2057 = pneg %p2056
      $region38: #{tpu_custom_call.1} parent=5 // pred_check_branch
        %2059 = sbr.rel (%p2057) target = $region40
      $region39: #{tpu_custom_call.1} parent=5 // pred_region
        %s2060 = ssub.s32 %s12, 2
        // Predicated region
        $region41: #{tpu_custom_call.1} parent=39 // pred_check
          %p2061 = pneg %p114
        $region42: #{tpu_custom_call.1} parent=39 // pred_check_branch
          %2063 = sbr.rel (%p2061) target = $region44
        $region43: #{tpu_custom_call.1} parent=39 // pred_region
          %s2064 = sand.u32 %s99, 1
          %s2065 = scalar_lea.sflag [#allocation3], %s2064
          %s2066 = sand.u32 %s99, 1
          %s2067 = scalar_lea.vmem [#allocation2], %s2066
          %2068 = dma.done %s2065, 16
        $region44: #{tpu_custom_call.1} parent=39 // pred_fallthru
          _
      $region40: #{tpu_custom_call.1} parent=5 // pred_fallthru
        _
    $region6: #{tpu_custom_call.1} parent=1 // loop_footer
      %s16 = sadd.s32 1, %s12
    $region7: #{tpu_custom_call.1} parent=1 // loop_footer_branch
      %11 = sbr.rel target = $region3
    $region8: #{tpu_custom_call.1} parent=1 // loop_exit
      _
    %2069 = vsyncpa [#allocation3], 1
    %s2070 = scalar_lea.sflag [#allocation3], 1
    %2071 = vsyncpa %s2070, 1

</llo_original>
